<compile_context>
chip_gen: v7x
topology: tpu7x:2x2x1
jax: 0.10.0
libtpu: 0.0.40
codegen_flags: <defaults>
</compile_context>

<pallas_src>
import functools

import jax
import jax.numpy as jnp
from jax import lax
from jax.experimental import pallas as pl
from jax.experimental.pallas import tpu as pltpu


def _gaussian_kernel_body(neg_inv_s2_ref, xn_ref, yn_ref, x_ref, y_ref, o_ref):
    # x_ref : (d, tm)   tile of X (native, feature-first layout)
    # y_ref : (d, tn)   tile of Y
    # xn_ref: (tm, 1)   precomputed squared column norms of X
    # yn_ref: (1, tn)   precomputed squared column norms of Y (lane-major)
    # o_ref : (tm, tn)  output tile
    xy = lax.dot_general(
        x_ref[...], y_ref[...],
        dimension_numbers=(((0,), (0,)), ((), ())),   # contract the d axis
        preferred_element_type=jnp.float32)           # (tm, tn) on the MXU
    d2 = xn_ref[...] + yn_ref[...] - 2.0 * xy         # ||x - y||^2, broadcasted
    d2 = jnp.maximum(d2, 1e-30)                       # clamp_min_(1e-30)
    # The reference's sqrt().pow_(2) is an identity after the clamp -> dropped.
    o_ref[...] = jnp.exp(d2 * neg_inv_s2_ref[0])


@functools.partial(jax.jit, static_argnames=("tm", "tn"))
def _gaussian_kernel_call(X, Y, sigma2, *, tm, tn):
    d, N = X.shape
    d2_, M = Y.shape
    assert d == d2_, (X.shape, Y.shape)
    assert N % tm == 0 and M % tn == 0, (N, M, tm, tn)

    Xf = X.astype(jnp.float32)
    Yf = Y.astype(jnp.float32)

    # Hoisted squared column norms (cheap XLA reductions over d, done once).
    x_norm = jnp.sum(Xf * Xf, axis=0).reshape(N, 1)   # (N, 1)
    y_norm = jnp.sum(Yf * Yf, axis=0).reshape(1, M)   # (1, M)

    neg_inv_s2 = (-1.0 / sigma2.astype(jnp.float32)).reshape((1,))

    grid_spec = pltpu.PrefetchScalarGridSpec(
        num_scalar_prefetch=1,                        # -1/sigma2 -> SMEM
        grid=(N // tm, M // tn),
        in_specs=[
            pl.BlockSpec((tm, 1), lambda i, j, s: (i, 0)),   # x_norm tile
            pl.BlockSpec((1, tn), lambda i, j, s: (0, j)),   # y_norm tile
            pl.BlockSpec((d, tm), lambda i, j, s: (0, i)),   # X tile
            pl.BlockSpec((d, tn), lambda i, j, s: (0, j)),   # Y tile
        ],
        out_specs=pl.BlockSpec((tm, tn), lambda i, j, s: (i, j)),
    )

    return pl.pallas_call(
        _gaussian_kernel_body,
        out_shape=jax.ShapeDtypeStruct((N, M), jnp.float32),
        grid_spec=grid_spec,
        compiler_params=pltpu.CompilerParams(
            dimension_semantics=("parallel", "parallel")),
    )(neg_inv_s2, x_norm, y_norm, Xf, Yf)


def _pick_tile(n, preferred):
    """Largest multiple of 128 <= preferred dividing n, else the full extent."""
    if n <= preferred:
        return n
    t = (preferred // 128) * 128
    while t >= 128:
        if n % t == 0:
            return t
        t -= 128
    return n


def gaussian_kernel_pallas(X, Y=None, sigma2=50.0, *, tm=None, tn=None):
    """Mirrors GaussianKernelTorch.forward: X (d, N), Y (d, M) -> (N, M)."""
    if Y is None:
        Y = X                                # self-Gram path of the module
    d, N = X.shape
    _, M = Y.shape
    if tm is None:
        tm = _pick_tile(N, 256)
    if tn is None:
        tn = _pick_tile(M, 512)              # output lane axis: big & lane-dense
    # TODO(synk): symmetric (Y is X) specialization that computes only the
    # upper-triangular tiles and mirrors them could halve the work.
    sigma2_arr = jnp.asarray(sigma2, dtype=jnp.float32)
    return _gaussian_kernel_call(X, Y, sigma2_arr, tm=tm, tn=tn)


def gaussian_kernel_ref(X, Y, sigma2):
    """Pure-JAX reference mirroring the PyTorch forward exactly."""
    x1 = X.T
    x2 = Y.T
    x1_norm = jnp.sum(x1 ** 2, axis=-1, keepdims=True)
    x2_norm = jnp.sum(x2 ** 2, axis=-1, keepdims=True)
    res = x2_norm.T + (-2.0) * (x1 @ x2.T) + x1_norm
    dist = jnp.sqrt(jnp.maximum(res, 1e-30))
    return jnp.exp(-(dist ** 2) / sigma2)


if __name__ == "__main__":
    # Module __init__: sigma2 = 50.0 (non-trainable scalar parameter).
    sigma2 = jnp.float32(50.0)

    # Small shapes consistent with forward(): X is d x N, Y is d x M.
    d, N, M = 32, 512, 512
    key = jax.random.PRNGKey(0)
    kx, ky = jax.random.split(key)
    X = jax.random.normal(kx, (d, N), dtype=jnp.float32)
    Y = jax.random.normal(ky, (d, M), dtype=jnp.float32)

    out = jax.block_until_ready(gaussian_kernel_pallas(X, Y, sigma2))
    ref = gaussian_kernel_ref(X, Y, sigma2)
    assert out.shape == (N, M), out.shape
    assert jnp.allclose(out, ref, atol=1e-5, rtol=1e-5), float(
        jnp.max(jnp.abs(out - ref)))

    # Y=None path semantics (Y := X).
    out_xx = jax.block_until_ready(gaussian_kernel_pallas(X, None, sigma2))
    ref_xx = gaussian_kernel_ref(X, X, sigma2)
    assert jnp.allclose(out_xx, ref_xx, atol=1e-5, rtol=1e-5)

    # Exercise the tile picker on non-default shapes (full-extent fallback).
    d2_, N2, M2 = 16, 256, 128
    X2 = jax.random.normal(jax.random.PRNGKey(1), (d2_, N2), dtype=jnp.float32)
    Y2 = jax.random.normal(jax.random.PRNGKey(2), (d2_, M2), dtype=jnp.float32)
    out2 = jax.block_until_ready(gaussian_kernel_pallas(X2, Y2, sigma2))
    ref2 = gaussian_kernel_ref(X2, Y2, sigma2)
    assert jnp.allclose(out2, ref2, atol=1e-5, rtol=1e-5)

    print("KERNEL_OK")
</pallas_src>

<mosaic_0001>
module attributes {stable_mosaic.version = 11 : i64} {
  func.func @_gaussian_kernel_body(%arg0: i32, %arg1: i32, %arg2: memref<1xf32, #tpu.memory_space<smem>>, %arg3: memref<256x1xf32, #tpu.memory_space<vmem>>, %arg4: memref<1x512xf32, #tpu.memory_space<vmem>>, %arg5: memref<32x256xf32, #tpu.memory_space<vmem>>, %arg6: memref<32x512xf32, #tpu.memory_space<vmem>>, %arg7: memref<256x512xf32, #tpu.memory_space<vmem>>) attributes {dimension_semantics = [#tpu.dimension_semantics<parallel>, #tpu.dimension_semantics<parallel>], iteration_bounds = array<i64: 2, 1>, scalar_prefetch = 1 : i64, scratch_operands = 0 : i64, tpu.core_type = #tpu.core_type<tc>, window_params = [{transform_indices = @transform_0, window_bounds = array<i64: 256, 1>}, {transform_indices = @transform_1, window_bounds = array<i64: 1, 512>}, {transform_indices = @transform_2, window_bounds = array<i64: 32, 256>}, {transform_indices = @transform_3, window_bounds = array<i64: 32, 512>}, {transform_indices = @transform_4, window_bounds = array<i64: 256, 512>}]} {
    %c0 = arith.constant 0 : index
    %c0_0 = arith.constant 0 : index
    %0 = vector.load %arg5[%c0, %c0_0] : memref<32x256xf32, #tpu.memory_space<vmem>>, vector<32x256xf32>
    %c0_1 = arith.constant 0 : index
    %c0_2 = arith.constant 0 : index
    %1 = vector.load %arg6[%c0_1, %c0_2] : memref<32x512xf32, #tpu.memory_space<vmem>>, vector<32x512xf32>
    %cst = arith.constant dense<0.000000e+00> : vector<256x512xf32>
    %2 = tpu.matmul %0, %1, %cst {dimension_numbers = #tpu.dot_dimension_numbers<[0], [0], [1], [1], [0, 1, 1, 1], [], []>} : vector<32x256xf32>, vector<32x512xf32>, vector<256x512xf32> -> vector<256x512xf32>
    %c0_3 = arith.constant 0 : index
    %c0_4 = arith.constant 0 : index
    %3 = vector.load %arg3[%c0_3, %c0_4] : memref<256x1xf32, #tpu.memory_space<vmem>>, vector<256x1xf32>
    %c0_5 = arith.constant 0 : index
    %c0_6 = arith.constant 0 : index
    %4 = vector.load %arg4[%c0_5, %c0_6] : memref<1x512xf32, #tpu.memory_space<vmem>>, vector<1x512xf32>
    %5 = vector.broadcast %3 : vector<256x1xf32> to vector<256x512xf32>
    %6 = vector.broadcast %4 : vector<1x512xf32> to vector<256x512xf32>
    %7 = arith.addf %5, %6 : vector<256x512xf32>
    %cst_7 = arith.constant 2.000000e+00 : f32
    %8 = vector.broadcast %cst_7 : f32 to vector<256x512xf32>
    %9 = arith.mulf %8, %2 : vector<256x512xf32>
    %10 = arith.subf %7, %9 : vector<256x512xf32>
    %cst_8 = arith.constant 1.000000e-30 : f32
    %11 = vector.broadcast %cst_8 : f32 to vector<256x512xf32>
    %12 = arith.maximumf %10, %11 : vector<256x512xf32>
    %c0_9 = arith.constant 0 : index
    %13 = memref.load %arg2[%c0_9] : memref<1xf32, #tpu.memory_space<smem>>
    %14 = vector.broadcast %13 : f32 to vector<256x512xf32>
    %15 = arith.mulf %12, %14 : vector<256x512xf32>
    %16 = math.exp %15 : vector<256x512xf32>
    %c0_10 = arith.constant 0 : index
    %c0_11 = arith.constant 0 : index
    %17 = vector.load %arg7[%c0_10, %c0_11] : memref<256x512xf32, #tpu.memory_space<vmem>>, vector<256x512xf32>
    tpu.vector_store %arg7[%c0_10, %c0_11], %16 {strides = array<i32>} : memref<256x512xf32, #tpu.memory_space<vmem>>, vector<256x512xf32>,
    return
  }
  func.func @transform_0(%arg0: i32, %arg1: i32, %arg2: memref<1xf32, #tpu.memory_space<smem>>) -> (i32, i32) {
    %c0_i32 = arith.constant 0 : i32
    %c0_i32_0 = arith.constant 0 : i32
    return %arg0, %c0_i32 : i32, i32
  }
  func.func @transform_1(%arg0: i32, %arg1: i32, %arg2: memref<1xf32, #tpu.memory_space<smem>>) -> (i32, i32) {
    %c0_i32 = arith.constant 0 : i32
    %c0_i32_0 = arith.constant 0 : i32
    return %c0_i32, %arg1 : i32, i32
  }
  func.func @transform_2(%arg0: i32, %arg1: i32, %arg2: memref<1xf32, #tpu.memory_space<smem>>) -> (i32, i32) {
    %c0_i32 = arith.constant 0 : i32
    %c0_i32_0 = arith.constant 0 : i32
    return %c0_i32, %arg0 : i32, i32
  }
  func.func @transform_3(%arg0: i32, %arg1: i32, %arg2: memref<1xf32, #tpu.memory_space<smem>>) -> (i32, i32) {
    %c0_i32 = arith.constant 0 : i32
    %c0_i32_0 = arith.constant 0 : i32
    return %c0_i32, %arg1 : i32, i32
  }
  func.func @transform_4(%arg0: i32, %arg1: i32, %arg2: memref<1xf32, #tpu.memory_space<smem>>) -> (i32, i32) {
    %c0_i32 = arith.constant 0 : i32
    return %arg0, %arg1 : i32, i32
  }
}

</mosaic_0001>

<llo_original>
// kernel: _gaussian_kernel_call.1
$region0: #{_gaussian_kernel_call.1}
  #allocation0 [shape = 'u32[]', space=smem, size = 0x4, offset = 0x4, fixed_abs, tag = 'smem constant byte address 0x4 - core index']
  #allocation1 [shape = 'u32[144,128]{1,0:T(1,128)}', space=vmem, size = 0x12000, scoped, tag = 'internal scratch']
  #allocation2 [shape = 's32[1]{0}', space=sflag, size = 0x4, scoped, tag = 'scoped memory for _gaussian_kernel_call.1']
  #allocation3 [shape = 'f32[1]{0:T(128)S(6)}', space=smem, size = 0x200, scoped, tag = 'prefetched SMEM operand 0']
  %s0 = inlined_call_operand.<no memory space> [shape: f32[1], index: 0, kind: input, shape index: {}]
  %s1 = inlined_call_operand.vmem [shape: f32[512,1], index: 1, kind: input, shape index: {}]
  %s2 = inlined_call_operand.vmem [shape: f32[1,512], index: 2, kind: input, shape index: {}]
  %s3 = inlined_call_operand.vmem [shape: f32[32,512], index: 3, kind: input, shape index: {}]
  %s4 = inlined_call_operand.vmem [shape: f32[32,512], index: 4, kind: input, shape index: {}]
  %s5 = inlined_call_operand.hbm [shape: f32[512,512], index: 5, kind: output, shape index: {}]
  %s6 = sld [smem:[#allocation0]]
  $region72: #{_gaussian_kernel_call.1} parent=0
    _
  %s8 = ssub.s32 1, %s6
  %s9 = scalar_select 0, %s8, %s6
  %10 = sst [smem:[#allocation3]] %s0
  $region1: #{_gaussian_kernel_call.1} parent=0
    #allocation4 [shape = 'u8[65536]{0}', space=vmem, size = 0x10000, scoped, tag = 'input window, operand 3']
    #allocation5 [shape = 'u8[1048576]{0}', space=vmem, size = 0x100000, scoped, tag = 'output window, operand 0']
    #allocation6 [shape = 's32[2]{0}', space=sflag, size = 0x8, scoped, tag = 'scoped memory for _gaussian_kernel_call.1']
    %11 = vsyncpa [#allocation6], 0
    %s12 = scalar_lea.sflag [#allocation6], 1
    %13 = vsyncpa %s12, 0
    loop: start=0, step=1, limit=4
    $region2: #{_gaussian_kernel_call.1} parent=1 // loop_pre_header
      _
    $region3: #{_gaussian_kernel_call.1} parent=1 // loop_header
      %s15 = sphi 0, %s19
      %p16 = scmp.ge.s32.totalorder %s15, 4
      %s22 = sphi 0, %s34
      %s23 = sphi 0, %s30
      %s24 = sphi 0, %s22
      %s25 = sphi 0, %s23
      %s26 = sphi 0, %s24
      %s27 = sphi 0, %s25
      %s37 = sphi 0, %s39
      %s40 = sphi 0, %s37
      %s41 = sphi 0, %s40
      %s57 = sphi 0, %s41
      %s63 = sphi 0, %s65
      %s66 = sphi 0, %s63
      %s67 = sphi 0, %s66
      %s83 = sphi 0, %s67
      %s89 = sphi 0, %s91
      %s92 = sphi 0, %s89
      %s93 = sphi 0, %s92
      %s109 = sphi 0, %s93
      %s115 = sphi 0, %s117
      %s118 = sphi 0, %s115
      %s119 = sphi 0, %s118
      %s135 = sphi 0, %s119
      %s143 = sphi 0, %s145
      %s146 = sphi 0, %s143
      %s147 = sphi 0, %s146
      %s163 = sphi 0, %s147
    $region4: #{_gaussian_kernel_call.1} parent=1 // loop_header_branch
      %18 = sbr.rel (%p16) target = $region8
    $region5: #{_gaussian_kernel_call.1} parent=1 // loop_body
      %s20 = ssub.s32 %s15, 1
      %s21 = ssub.s32 %s15, 2
      %s28 = sadd.s32 1, %s23
      %p29 = scmp.ge.s32.totalorder %s28, 1
      %s30 = scalar_select %p29, 0, %s28
      %s31 = sadd.s32 1, %s22
      %s32 = scalar_select %p29, %s31, %s22
      %p33 = scmp.ge.s32.totalorder %s32, 2
      %s34 = scalar_select %p33, 0, %s32
      %s35 = ssub.s32 %s22, %s34
      %p36 = scmp.eq.s32.totalorder %s35, 0
      %s38 = sadd.s32 %s37, 1
      %s39 = scalar_select %p36, %s37, %s38
      %p42 = pneg %p36
      %p43 = scmp.eq.s32.totalorder %s15, 1
      %p44 = por %p42, %p43
      %p45 = scmp.ne.s32.totalorder %s37, %s40
      %p46 = scmp.eq.s32.totalorder %s15, 0
      %p47 = por %p45, %p46
      %p48 = scmp.ne.s32.totalorder %s37, %s40
      %p49 = scmp.eq.s32.totalorder %s20, 1
      %p50 = por %p48, %p49
      %p51 = scmp.ne.s32.totalorder %s40, %s41
      %p52 = scmp.eq.s32.totalorder %s20, 0
      %p53 = por %p51, %p52
      %p54 = scmp.ne.s32.totalorder %s40, %s41
      %p55 = scmp.eq.s32.totalorder %s21, 1
      %p56 = por %p54, %p55
      %p58 = scmp.ne.s32.totalorder %s41, %s57
      %p59 = scmp.eq.s32.totalorder %s21, 0
      %p60 = por %p58, %p59
      %s61 = ssub.s32 %s23, %s30
      %p62 = scmp.eq.s32.totalorder %s61, 0
      %s64 = sadd.s32 %s63, 1
      %s65 = scalar_select %p62, %s63, %s64
      %p68 = pneg %p62
      %p69 = scmp.eq.s32.totalorder %s15, 1
      %p70 = por %p68, %p69
      %p71 = scmp.ne.s32.totalorder %s63, %s66
      %p72 = scmp.eq.s32.totalorder %s15, 0
      %p73 = por %p71, %p72
      %p74 = scmp.ne.s32.totalorder %s63, %s66
      %p75 = scmp.eq.s32.totalorder %s20, 1
      %p76 = por %p74, %p75
      %p77 = scmp.ne.s32.totalorder %s66, %s67
      %p78 = scmp.eq.s32.totalorder %s20, 0
      %p79 = por %p77, %p78
      %p80 = scmp.ne.s32.totalorder %s66, %s67
      %p81 = scmp.eq.s32.totalorder %s21, 1
      %p82 = por %p80, %p81
      %p84 = scmp.ne.s32.totalorder %s67, %s83
      %p85 = scmp.eq.s32.totalorder %s21, 0
      %p86 = por %p84, %p85
      %s87 = ssub.s32 %s22, %s34
      %p88 = scmp.eq.s32.totalorder %s87, 0
      %s90 = sadd.s32 %s89, 1
      %s91 = scalar_select %p88, %s89, %s90
      %p94 = pneg %p88
      %p95 = scmp.eq.s32.totalorder %s15, 1
      %p96 = por %p94, %p95
      %p97 = scmp.ne.s32.totalorder %s89, %s92
      %p98 = scmp.eq.s32.totalorder %s15, 0
      %p99 = por %p97, %p98
      %p100 = scmp.ne.s32.totalorder %s89, %s92
      %p101 = scmp.eq.s32.totalorder %s20, 1
      %p102 = por %p100, %p101
      %p103 = scmp.ne.s32.totalorder %s92, %s93
      %p104 = scmp.eq.s32.totalorder %s20, 0
      %p105 = por %p103, %p104
      %p106 = scmp.ne.s32.totalorder %s92, %s93
      %p107 = scmp.eq.s32.totalorder %s21, 1
      %p108 = por %p106, %p107
      %p110 = scmp.ne.s32.totalorder %s93, %s109
      %p111 = scmp.eq.s32.totalorder %s21, 0
      %p112 = por %p110, %p111
      %s113 = ssub.s32 %s23, %s30
      %p114 = scmp.eq.s32.totalorder %s113, 0
      %s116 = sadd.s32 %s115, 1
      %s117 = scalar_select %p114, %s115, %s116
      %p120 = pneg %p114
      %p121 = scmp.eq.s32.totalorder %s15, 1
      %p122 = por %p120, %p121
      %p123 = scmp.ne.s32.totalorder %s115, %s118
      %p124 = scmp.eq.s32.totalorder %s15, 0
      %p125 = por %p123, %p124
      %p126 = scmp.ne.s32.totalorder %s115, %s118
      %p127 = scmp.eq.s32.totalorder %s20, 1
      %p128 = por %p126, %p127
      %p129 = scmp.ne.s32.totalorder %s118, %s119
      %p130 = scmp.eq.s32.totalorder %s20, 0
      %p131 = por %p129, %p130
      %p132 = scmp.ne.s32.totalorder %s118, %s119
      %p133 = scmp.eq.s32.totalorder %s21, 1
      %p134 = por %p132, %p133
      %p136 = scmp.ne.s32.totalorder %s119, %s135
      %p137 = scmp.eq.s32.totalorder %s21, 0
      %p138 = por %p136, %p137
      %s139 = ssub.s32 %s22, %s34
      %s140 = ssub.s32 %s23, %s30
      %s141 = sor.u32 %s139, %s140
      %p142 = scmp.eq.s32.totalorder %s141, 0
      %s144 = sadd.s32 %s143, 1
      %s145 = scalar_select %p142, %s143, %s144
      %p148 = pneg %p142
      %p149 = scmp.eq.s32.totalorder %s15, 1
      %p150 = por %p148, %p149
      %p151 = scmp.ne.s32.totalorder %s143, %s146
      %p152 = scmp.eq.s32.totalorder %s15, 0
      %p153 = por %p151, %p152
      %p154 = scmp.ne.s32.totalorder %s143, %s146
      %p155 = scmp.eq.s32.totalorder %s20, 1
      %p156 = por %p154, %p155
      %p157 = scmp.ne.s32.totalorder %s146, %s147
      %p158 = scmp.eq.s32.totalorder %s20, 0
      %p159 = por %p157, %p158
      %p160 = scmp.ne.s32.totalorder %s146, %s147
      %p161 = scmp.eq.s32.totalorder %s21, 1
      %p162 = por %p160, %p161
      %p164 = scmp.ne.s32.totalorder %s147, %s163
      %p165 = scmp.eq.s32.totalorder %s21, 0
      %p166 = por %p164, %p165
      %p167 = scmp.le.s32.totalorder 1, %s15
      %p168 = scmp.lt.s32.totalorder %s15, 3
      %p169 = pnand %p167, %p168
      %p170 = pneg %p169
      // Predicated region
      $region9: #{_gaussian_kernel_call.1} parent=5 // pred_check
        _
      $region10: #{_gaussian_kernel_call.1} parent=5 // pred_check_branch
        %172 = sbr.rel (%p169) target = $region12
      $region11: #{_gaussian_kernel_call.1} parent=5 // pred_region
        %s173 = ssub.s32 %s15, 1
        // Predicated region
        $region13: #{_gaussian_kernel_call.1} parent=11 // pred_check
          %p174 = pneg %p79
        $region14: #{_gaussian_kernel_call.1} parent=11 // pred_check_branch
          %176 = sbr.rel (%p174) target = $region16
        $region15: #{_gaussian_kernel_call.1} parent=11 // pred_region
          %s177 = smul.u32 4, %s25
          %p178 = scmp.lt.s32.totalorder %s177, 3
          %s179 = scalar_select %p178, %s177, 3
          %s180 = scalar_lea.vmem %s2, %s179
          %s181 = smul.u32 4, %s25
        $region16: #{_gaussian_kernel_call.1} parent=11 // pred_fallthru
          _
        // Predicated region
        $region17: #{_gaussian_kernel_call.1} parent=11 // pred_check
          %p182 = pneg %p131
        $region18: #{_gaussian_kernel_call.1} parent=11 // pred_check_branch
          %184 = sbr.rel (%p182) target = $region20
        $region19: #{_gaussian_kernel_call.1} parent=11 // pred_region
          %s185 = smul.u32 4, %s25
          %p186 = scmp.lt.s32.totalorder %s185, 3
          %s187 = scalar_select %p186, %s185, 3
          %s188 = smul.addr %s187, 8
          %s189 = scalar_lea.vmem %s4, %s188
          %s190 = smul.u32 4, %s25
        $region20: #{_gaussian_kernel_call.1} parent=11 // pred_fallthru
          _
      $region12: #{_gaussian_kernel_call.1} parent=5 // pred_fallthru
        _
      %p191 = scmp.lt.s32.totalorder %s15, 2
      // Predicated region
      $region21: #{_gaussian_kernel_call.1} parent=5 // pred_check
        %p192 = pneg %p191
      $region22: #{_gaussian_kernel_call.1} parent=5 // pred_check_branch
        %194 = sbr.rel (%p192) target = $region24
      $region23: #{_gaussian_kernel_call.1} parent=5 // pred_region
        // Predicated region
        $region25: #{_gaussian_kernel_call.1} parent=23 // pred_check
          %p195 = pneg %p47
        $region26: #{_gaussian_kernel_call.1} parent=23 // pred_check_branch
          %197 = sbr.rel (%p195) target = $region28
        $region27: #{_gaussian_kernel_call.1} parent=23 // pred_region
          %s198 = smul.u32 32, %s22
          %p199 = scmp.lt.s32.totalorder %s198, 63
          %s200 = scalar_select %p199, %s198, 63
          %s201 = smul.addr %s200, 8
          %s202 = scalar_lea.vmem %s1, %s201
          %s203 = smul.u32 32, %s22
        $region28: #{_gaussian_kernel_call.1} parent=23 // pred_fallthru
          _
        // Predicated region
        $region29: #{_gaussian_kernel_call.1} parent=23 // pred_check
          %p204 = pneg %p99
        $region30: #{_gaussian_kernel_call.1} parent=23 // pred_check_branch
          %206 = sbr.rel (%p204) target = $region32
        $region31: #{_gaussian_kernel_call.1} parent=23 // pred_region
          %s207 = sand.u32 %s89, 1
          %s208 = sand.u32 %s89, 1
          %s209 = smul.addr %s208, 64
          %s210 = scalar_lea.vmem [#allocation4], %s209
          %s211 = smul.u32 2, %s22
          %s212 = smul.addr %s211, 8
          %s213 = scalar_lea.vmem %s3, %s212
          // Predicated region
          $region33: #{_gaussian_kernel_call.1} parent=31 // pred_check
            _
          $region34: #{_gaussian_kernel_call.1} parent=31 // pred_check_branch
            %215 = sbr.rel (0) target = $region36
          $region35: #{_gaussian_kernel_call.1} parent=31 // pred_region
            // Predicated region
            $region37: #{_gaussian_kernel_call.1} parent=35 // pred_check
              _
            $region38: #{_gaussian_kernel_call.1} parent=35 // pred_check_branch
              %217 = sbr.rel (0) target = $region40
            $region39: #{_gaussian_kernel_call.1} parent=35 // pred_region
              loop: start=0, step=1, limit=1
              $region41: #{_gaussian_kernel_call.1} parent=39 // loop_pre_header
                _
              $region42: #{_gaussian_kernel_call.1} parent=39 // loop_header
                %s219 = sphi 0, %s223
                %p220 = scmp.ge.s32.totalorder %s219, 1
                %s224 = sphi %s213, %s213
                %s225 = sphi %s210, %s210
              $region43: #{_gaussian_kernel_call.1} parent=39 // loop_header_branch
                %222 = sbr.rel (%p220) target = $region47
              $region44: #{_gaussian_kernel_call.1} parent=39 // loop_body
                %v226 = vld [vmem:[%s224] sm:$0xff]
                %227 = vst [vmem:[%s225] sm:$0xff] %v226
                %v228 = vld [vmem:[%s224 + $0x8] sm:$0xff]
                %229 = vst [vmem:[%s225 + $0x8] sm:$0xff] %v228
                %v230 = vld [vmem:[%s224 + $0x20] sm:$0xff]
                %231 = vst [vmem:[%s225 + $0x10] sm:$0xff] %v230
                %v232 = vld [vmem:[%s224 + $0x28] sm:$0xff]
                %233 = vst [vmem:[%s225 + $0x18] sm:$0xff] %v232
                %v234 = vld [vmem:[%s224 + $0x40] sm:$0xff]
                %235 = vst [vmem:[%s225 + $0x20] sm:$0xff] %v234
                %v236 = vld [vmem:[%s224 + $0x48] sm:$0xff]
                %237 = vst [vmem:[%s225 + $0x28] sm:$0xff] %v236
                %v238 = vld [vmem:[%s224 + $0x60] sm:$0xff]
                %239 = vst [vmem:[%s225 + $0x30] sm:$0xff] %v238
                %v240 = vld [vmem:[%s224 + $0x68] sm:$0xff]
                %241 = vst [vmem:[%s225 + $0x38] sm:$0xff] %v240
              $region45: #{_gaussian_kernel_call.1} parent=39 // loop_footer
                %s223 = sadd.s32 1, %s219
              $region46: #{_gaussian_kernel_call.1} parent=39 // loop_footer_branch
                %218 = sbr.rel target = $region42
              $region47: #{_gaussian_kernel_call.1} parent=39 // loop_exit
                _
            $region40: #{_gaussian_kernel_call.1} parent=35 // pred_fallthru
              _
            // Predicated region
            $region48: #{_gaussian_kernel_call.1} parent=35 // pred_check
              _
            $region49: #{_gaussian_kernel_call.1} parent=35 // pred_check_branch
              %243 = sbr.rel target = $region51
            $region50: #{_gaussian_kernel_call.1} parent=35 // pred_region
              _
            $region51: #{_gaussian_kernel_call.1} parent=35 // pred_fallthru
              _
          $region36: #{_gaussian_kernel_call.1} parent=31 // pred_fallthru
            _
          %244 = vnop
        $region32: #{_gaussian_kernel_call.1} parent=23 // pred_fallthru
          _
      $region24: #{_gaussian_kernel_call.1} parent=5 // pred_fallthru
        _
      %p245 = scmp.le.s32.totalorder 1, %s15
      %p246 = scmp.lt.s32.totalorder %s15, 3
      %p247 = pnand %p245, %p246
      %p248 = pneg %p247
      // Predicated region
      $region52: #{_gaussian_kernel_call.1} parent=5 // pred_check
        _
      $region53: #{_gaussian_kernel_call.1} parent=5 // pred_check_branch
        %250 = sbr.rel (%p247) target = $region55
      $region54: #{_gaussian_kernel_call.1} parent=5 // pred_region
        %s251 = ssub.s32 %s15, 1
        %s252 = sand.u32 %s92, 1
        %s253 = sand.u32 %s92, 1
        %s254 = smul.addr %s253, 64
        %s255 = scalar_lea.vmem [#allocation4], %s254
        // Predicated region
        $region56: #{_gaussian_kernel_call.1} parent=54 // pred_check
          %p256 = pneg %p105
        $region57: #{_gaussian_kernel_call.1} parent=54 // pred_check_branch
          %258 = sbr.rel (%p256) target = $region59
        $region58: #{_gaussian_kernel_call.1} parent=54 // pred_region
          _
        $region59: #{_gaussian_kernel_call.1} parent=54 // pred_fallthru
          _
        %s259 = smul.u32 32, %s24
        %p260 = scmp.lt.s32.totalorder %s259, 63
        %s261 = scalar_select %p260, %s259, 63
        %s262 = smul.addr %s261, 8
        %s263 = scalar_lea.vmem %s1, %s262
        %p264 = pneg %p53
        %p265 = pneg %p50
        %s266 = smul.u32 4, %s25
        %p267 = scmp.lt.s32.totalorder %s266, 3
        %s268 = scalar_select %p267, %s266, 3
        %s269 = scalar_lea.vmem %s2, %s268
        %p270 = pneg %p79
        %p271 = pneg %p76
        %s272 = sand.u32 %s92, 1
        %s273 = sand.u32 %s92, 1
        %s274 = smul.addr %s273, 64
        %s275 = scalar_lea.vmem [#allocation4], %s274
        %p276 = pneg %p105
        %p277 = pneg %p102
        %s278 = smul.u32 4, %s25
        %p279 = scmp.lt.s32.totalorder %s278, 3
        %s280 = scalar_select %p279, %s278, 3
        %s281 = smul.addr %s280, 8
        %s282 = scalar_lea.vmem %s4, %s281
        %p283 = pneg %p131
        %p284 = pneg %p128
        %p285 = pneg %p159
        %p286 = pneg %p156
        %s287 = sand.u32 %s146, 1
        %s288 = scalar_lea.sflag [#allocation6], %s287
        %s289 = sand.u32 %s146, 1
        %s290 = smul.addr %s289, 1024
        %s291 = scalar_lea.vmem [#allocation5], %s290
        %s292 = smul.u32 32, %s24
        %p293 = scmp.lt.s32.totalorder %s292, 63
        %s294 = scalar_select %p293, %s292, 63
        %s295 = smul.addr %s294, 8
        %s296 = scalar_lea.vmem %s1, %s295
        %s297 = smul.u32 32, %s24
        %s298 = smul.u32 4, %s25
        %p299 = scmp.lt.s32.totalorder %s298, 3
        %s300 = scalar_select %p299, %s298, 3
        %s301 = scalar_lea.vmem %s2, %s300
        %s302 = smul.u32 4, %s25
        %s303 = smul.u32 2, %s24
        %s304 = smul.u32 4, %s25
        %p305 = scmp.lt.s32.totalorder %s304, 3
        %s306 = scalar_select %p305, %s304, 3
        %s307 = smul.addr %s306, 8
        %s308 = scalar_lea.vmem %s4, %s307
        %s309 = smul.u32 4, %s25
        %s310 = smul.u32 32, %s24
        %s311 = smul.u32 4, %s25
        %v312 = vld [vmem:[%s255] sm:$0xff]
        %v313 = vld [vmem:[%s255 + $0x8] sm:$0xff]
        %v314 = vld [vmem:[%s255 + $0x10] sm:$0xff]
        %v315 = vld [vmem:[%s255 + $0x18] sm:$0xff]
        %v316 = vld [vmem:[%s255 + $0x20] sm:$0xff]
        %v317 = vld [vmem:[%s255 + $0x28] sm:$0xff]
        %v318 = vld [vmem:[%s255 + $0x30] sm:$0xff]
        %v319 = vld [vmem:[%s255 + $0x38] sm:$0xff]
        %v320 = vld [vmem:[%s308] sm:$0xff]
        %v321 = vld [vmem:[%s308 + $0x8] sm:$0xff]
        %v322 = vld [vmem:[%s308 + $0x10] sm:$0xff]
        %v323 = vld [vmem:[%s308 + $0x18] sm:$0xff]
        %v324 = vld [vmem:[%s308 + $0x20] sm:$0xff]
        %v325 = vld [vmem:[%s308 + $0x28] sm:$0xff]
        %v326 = vld [vmem:[%s308 + $0x30] sm:$0xff]
        %v327 = vld [vmem:[%s308 + $0x38] sm:$0xff]
        %v328 = vld [vmem:[%s308 + $0x40] sm:$0xff]
        %v329 = vld [vmem:[%s308 + $0x48] sm:$0xff]
        %v330 = vld [vmem:[%s308 + $0x50] sm:$0xff]
        %v331 = vld [vmem:[%s308 + $0x58] sm:$0xff]
        %v332 = vld [vmem:[%s308 + $0x60] sm:$0xff]
        %v333 = vld [vmem:[%s308 + $0x68] sm:$0xff]
        %v334 = vld [vmem:[%s308 + $0x70] sm:$0xff]
        %v335 = vld [vmem:[%s308 + $0x78] sm:$0xff]
        %336 = vxpose.xlu0.b32.start [1/16] %v312, 128
        %337 = vxpose.xlu0.b32.cont [2/16] %v314, 128
        %338 = vxpose.xlu0.b32.cont [3/16] %v316, 128
        %339 = vxpose.xlu0.b32.cont [4/16] %v318, 128
        %340 = vxpose.xlu0.b32.cont [5/16] 0.0, 128
        %341 = vxpose.xlu0.b32.cont [6/16] 0.0, 128
        %342 = vxpose.xlu0.b32.cont [7/16] 0.0, 128
        %343 = vxpose.xlu0.b32.cont [8/16] 0.0, 128
        %344 = vxpose.xlu0.b32.cont [9/16] 0.0, 128
        %345 = vxpose.xlu0.b32.cont [10/16] 0.0, 128
        %346 = vxpose.xlu0.b32.cont [11/16] 0.0, 128
        %347 = vxpose.xlu0.b32.cont [12/16] 0.0, 128
        %348 = vxpose.xlu0.b32.cont [13/16] 0.0, 128
        %349 = vxpose.xlu0.b32.cont [14/16] 0.0, 128
        %350 = vxpose.xlu0.b32.cont [15/16] 0.0, 128
        %351 = vxpose.xlu0.b32.end [16/16] 0.0, 128
        %v352 = vpop.trf.xlu0
        %v353 = vpop.trf.xlu0
        %v354 = vpop.trf.xlu0
        %v355 = vpop.trf.xlu0
        %v356 = vpop.trf.xlu0
        %v357 = vpop.trf.xlu0
        %v358 = vpop.trf.xlu0
        %v359 = vpop.trf.xlu0
        %v360 = vpop.trf.xlu0
        %v361 = vpop.trf.xlu0
        %v362 = vpop.trf.xlu0
        %v363 = vpop.trf.xlu0
        %v364 = vpop.trf.xlu0
        %v365 = vpop.trf.xlu0
        %v366 = vpop.trf.xlu0
        %v367 = vpop.trf.xlu0
        %368 = vxpose.xlu0.b32.start [1/16] %v313, 128
        %369 = vxpose.xlu0.b32.cont [2/16] %v315, 128
        %370 = vxpose.xlu0.b32.cont [3/16] %v317, 128
        %371 = vxpose.xlu0.b32.cont [4/16] %v319, 128
        %372 = vxpose.xlu0.b32.cont [5/16] 0.0, 128
        %373 = vxpose.xlu0.b32.cont [6/16] 0.0, 128
        %374 = vxpose.xlu0.b32.cont [7/16] 0.0, 128
        %375 = vxpose.xlu0.b32.cont [8/16] 0.0, 128
        %376 = vxpose.xlu0.b32.cont [9/16] 0.0, 128
        %377 = vxpose.xlu0.b32.cont [10/16] 0.0, 128
        %378 = vxpose.xlu0.b32.cont [11/16] 0.0, 128
        %379 = vxpose.xlu0.b32.cont [12/16] 0.0, 128
        %380 = vxpose.xlu0.b32.cont [13/16] 0.0, 128
        %381 = vxpose.xlu0.b32.cont [14/16] 0.0, 128
        %382 = vxpose.xlu0.b32.cont [15/16] 0.0, 128
        %383 = vxpose.xlu0.b32.end [16/16] 0.0, 128
        %v384 = vpop.trf.xlu0
        %v385 = vpop.trf.xlu0
        %v386 = vpop.trf.xlu0
        %v387 = vpop.trf.xlu0
        %v388 = vpop.trf.xlu0
        %v389 = vpop.trf.xlu0
        %v390 = vpop.trf.xlu0
        %v391 = vpop.trf.xlu0
        %v392 = vpop.trf.xlu0
        %v393 = vpop.trf.xlu0
        %v394 = vpop.trf.xlu0
        %v395 = vpop.trf.xlu0
        %v396 = vpop.trf.xlu0
        %v397 = vpop.trf.xlu0
        %v398 = vpop.trf.xlu0
        %v399 = vpop.trf.xlu0
        %vm400 = vcmask 261120
        %v402 = vsel %vm400, %v352, 0
        %v405 = vsel %vm400, %v353, 0
        %v408 = vsel %vm400, %v354, 0
        %v411 = vsel %vm400, %v355, 0
        %v414 = vsel %vm400, %v356, 0
        %v417 = vsel %vm400, %v357, 0
        %v420 = vsel %vm400, %v358, 0
        %v423 = vsel %vm400, %v359, 0
        %v426 = vsel %vm400, %v360, 0
        %v429 = vsel %vm400, %v361, 0
        %v432 = vsel %vm400, %v362, 0
        %v435 = vsel %vm400, %v363, 0
        %v438 = vsel %vm400, %v364, 0
        %v441 = vsel %vm400, %v365, 0
        %v444 = vsel %vm400, %v366, 0
        %v447 = vsel %vm400, %v367, 0
        %v450 = vsel %vm400, %v384, 0
        %v453 = vsel %vm400, %v385, 0
        %v456 = vsel %vm400, %v386, 0
        %v459 = vsel %vm400, %v387, 0
        %v462 = vsel %vm400, %v388, 0
        %v465 = vsel %vm400, %v389, 0
        %v468 = vsel %vm400, %v390, 0
        %v471 = vsel %vm400, %v391, 0
        %v474 = vsel %vm400, %v392, 0
        %v477 = vsel %vm400, %v393, 0
        %v480 = vsel %vm400, %v394, 0
        %v483 = vsel %vm400, %v395, 0
        %v486 = vsel %vm400, %v396, 0
        %v489 = vsel %vm400, %v397, 0
        %v492 = vsel %vm400, %v398, 0
        %v495 = vsel %vm400, %v399, 0
        %497 = vmatprep.subr.mxu0 %v321
        %498 = vmatpush1.msra.mxu0 %v320
        %499 = vmatprep.subr.mxu0 %v325
        %500 = vmatpush1.msra.mxu0 %v324
        %501 = vmatprep.subr.mxu0 %v329
        %502 = vmatpush1.msra.mxu0 %v328
        %503 = vmatprep.subr.mxu0 %v333
        %504 = vmatpush1.msra.mxu0 %v332
        %505 = vmatprep.subr.mxu0 0.0
        %506 = vmatpush1.msra.mxu0 0.0
        %507 = vmatprep.subr.mxu0 0.0
        %508 = vmatpush1.msra.mxu0 0.0
        %509 = vmatprep.subr.mxu0 0.0
        %510 = vmatpush1.msra.mxu0 0.0
        %511 = vmatprep.subr.mxu0 0.0
        %512 = vmatpush1.msra.mxu0 0.0
        %513 = vmatprep.subr.mxu0 0.0
        %514 = vmatpush1.msra.mxu0 0.0
        %515 = vmatprep.subr.mxu0 0.0
        %516 = vmatpush1.msra.mxu0 0.0
        %517 = vmatprep.subr.mxu0 0.0
        %518 = vmatpush1.msra.mxu0 0.0
        %519 = vmatprep.subr.mxu0 0.0
        %520 = vmatpush1.msra.mxu0 0.0
        %521 = vmatprep.subr.mxu0 0.0
        %522 = vmatpush1.msra.mxu0 0.0
        %523 = vmatprep.subr.mxu0 0.0
        %524 = vmatpush1.msra.mxu0 0.0
        %525 = vmatprep.subr.mxu0 0.0
        %526 = vmatpush1.msra.mxu0 0.0
        %527 = vmatprep.subr.mxu0 0.0
        %528 = vmatpush1.msra.mxu0 0.0
        %529 = vmatprep.subr.mxu0 0.0
        %530 = vmatpush1.msra.mxu0 0.0
        %531 = vmatprep.subr.mxu0 0.0
        %532 = vmatpush1.msra.mxu0 0.0
        %533 = vmatprep.subr.mxu0 0.0
        %534 = vmatpush1.msra.mxu0 0.0
        %535 = vmatprep.subr.mxu0 0.0
        %536 = vmatpush1.msra.mxu0 0.0
        %537 = vmatprep.subr.mxu0 0.0
        %538 = vmatpush1.msra.mxu0 0.0
        %539 = vmatprep.subr.mxu0 0.0
        %540 = vmatpush1.msra.mxu0 0.0
        %541 = vmatprep.subr.mxu0 0.0
        %542 = vmatpush1.msra.mxu0 0.0
        %543 = vmatprep.subr.mxu0 0.0
        %544 = vmatpush1.msra.mxu0 0.0
        %545 = vmatprep.subr.mxu0 0.0
        %546 = vmatpush1.msra.mxu0 0.0
        %547 = vmatprep.subr.mxu0 0.0
        %548 = vmatpush1.msra.mxu0 0.0
        %549 = vmatprep.subr.mxu0 0.0
        %550 = vmatpush1.msra.mxu0 0.0
        %551 = vmatprep.subr.mxu0 0.0
        %552 = vmatpush1.msra.mxu0 0.0
        %553 = vmatprep.subr.mxu0 0.0
        %554 = vmatpush1.msra.mxu0 0.0
        %555 = vmatprep.subr.mxu0 0.0
        %556 = vmatpush1.msra.mxu0 0.0
        %557 = vmatprep.subr.mxu0 0.0
        %558 = vmatpush1.msra.mxu0 0.0
        %559 = vmatprep.subr.mxu0 0.0
        %560 = vmatpush1.msra.mxu0 0.0
        %561 = vmatprep.mubr.f32.mxu0 0.0
        %562 = vmatmul.mubr.f32.gmra.mrb[0].mxu0 %v402
        %v563 = vpop.f32.mrb[0].mxu0
        %v564 = vadd.f32 0.0, %v563
        %v565 = vpop.f32.mrb[0].mxu0
        %v566 = vadd.f32 0.0, %v565
        %567 = vmatprep.mubr.f32.mxu0 0.0
        %568 = vmatmul.mubr.f32.gmra.mrb[0].mxu0 %v405
        %v569 = vpop.f32.mrb[0].mxu0
        %v570 = vadd.f32 0.0, %v569
        %v571 = vpop.f32.mrb[0].mxu0
        %v572 = vadd.f32 0.0, %v571
        %573 = vmatprep.mubr.f32.mxu0 0.0
        %574 = vmatmul.mubr.f32.gmra.mrb[0].mxu0 %v408
        %v575 = vpop.f32.mrb[0].mxu0
        %v576 = vadd.f32 0.0, %v575
        %v577 = vpop.f32.mrb[0].mxu0
        %v578 = vadd.f32 0.0, %v577
        %579 = vmatprep.mubr.f32.mxu0 0.0
        %580 = vmatmul.mubr.f32.gmra.mrb[0].mxu0 %v411
        %v581 = vpop.f32.mrb[0].mxu0
        %v582 = vadd.f32 0.0, %v581
        %v583 = vpop.f32.mrb[0].mxu0
        %v584 = vadd.f32 0.0, %v583
        %585 = vmatprep.mubr.f32.mxu0 0.0
        %586 = vmatmul.mubr.f32.gmra.mrb[0].mxu0 %v414
        %v587 = vpop.f32.mrb[0].mxu0
        %v588 = vadd.f32 0.0, %v587
        %v589 = vpop.f32.mrb[0].mxu0
        %v590 = vadd.f32 0.0, %v589
        %591 = vmatprep.mubr.f32.mxu0 0.0
        %592 = vmatmul.mubr.f32.gmra.mrb[0].mxu0 %v417
        %v593 = vpop.f32.mrb[0].mxu0
        %v594 = vadd.f32 0.0, %v593
        %v595 = vpop.f32.mrb[0].mxu0
        %v596 = vadd.f32 0.0, %v595
        %597 = vmatprep.mubr.f32.mxu0 0.0
        %598 = vmatmul.mubr.f32.gmra.mrb[0].mxu0 %v420
        %v599 = vpop.f32.mrb[0].mxu0
        %v600 = vadd.f32 0.0, %v599
        %v601 = vpop.f32.mrb[0].mxu0
        %v602 = vadd.f32 0.0, %v601
        %603 = vmatprep.mubr.f32.mxu0 0.0
        %604 = vmatmul.mubr.f32.gmra.mrb[0].mxu0 %v423
        %v605 = vpop.f32.mrb[0].mxu0
        %v606 = vadd.f32 0.0, %v605
        %v607 = vpop.f32.mrb[0].mxu0
        %v608 = vadd.f32 0.0, %v607
        %609 = vmatprep.mubr.f32.mxu0 0.0
        %610 = vmatmul.mubr.f32.gmra.mrb[0].mxu0 %v426
        %v611 = vpop.f32.mrb[0].mxu0
        %v612 = vadd.f32 0.0, %v611
        %v613 = vpop.f32.mrb[0].mxu0
        %v614 = vadd.f32 0.0, %v613
        %615 = vmatprep.mubr.f32.mxu0 0.0
        %616 = vmatmul.mubr.f32.gmra.mrb[0].mxu0 %v429
        %v617 = vpop.f32.mrb[0].mxu0
        %v618 = vadd.f32 0.0, %v617
        %v619 = vpop.f32.mrb[0].mxu0
        %v620 = vadd.f32 0.0, %v619
        %621 = vmatprep.mubr.f32.mxu0 0.0
        %622 = vmatmul.mubr.f32.gmra.mrb[0].mxu0 %v432
        %v623 = vpop.f32.mrb[0].mxu0
        %v624 = vadd.f32 0.0, %v623
        %v625 = vpop.f32.mrb[0].mxu0
        %v626 = vadd.f32 0.0, %v625
        %627 = vmatprep.mubr.f32.mxu0 0.0
        %628 = vmatmul.mubr.f32.gmra.mrb[0].mxu0 %v435
        %v629 = vpop.f32.mrb[0].mxu0
        %v630 = vadd.f32 0.0, %v629
        %v631 = vpop.f32.mrb[0].mxu0
        %v632 = vadd.f32 0.0, %v631
        %633 = vmatprep.mubr.f32.mxu0 0.0
        %634 = vmatmul.mubr.f32.gmra.mrb[0].mxu0 %v438
        %v635 = vpop.f32.mrb[0].mxu0
        %v636 = vadd.f32 0.0, %v635
        %v637 = vpop.f32.mrb[0].mxu0
        %v638 = vadd.f32 0.0, %v637
        %639 = vmatprep.mubr.f32.mxu0 0.0
        %640 = vmatmul.mubr.f32.gmra.mrb[0].mxu0 %v441
        %v641 = vpop.f32.mrb[0].mxu0
        %v642 = vadd.f32 0.0, %v641
        %v643 = vpop.f32.mrb[0].mxu0
        %v644 = vadd.f32 0.0, %v643
        %645 = vmatprep.mubr.f32.mxu0 0.0
        %646 = vmatmul.mubr.f32.gmra.mrb[0].mxu0 %v444
        %v647 = vpop.f32.mrb[0].mxu0
        %v648 = vadd.f32 0.0, %v647
        %v649 = vpop.f32.mrb[0].mxu0
        %v650 = vadd.f32 0.0, %v649
        %651 = vmatprep.mubr.f32.mxu0 0.0
        %652 = vmatmul.mubr.f32.gmra.mrb[0].mxu0 %v447
        %v653 = vpop.f32.mrb[0].mxu0
        %v654 = vadd.f32 0.0, %v653
        %v655 = vpop.f32.mrb[0].mxu0
        %v656 = vadd.f32 0.0, %v655
        %657 = vmatprep.mubr.f32.mxu0 0.0
        %658 = vmatmul.mubr.f32.gmra.mrb[0].mxu0 %v450
        %v659 = vpop.f32.mrb[0].mxu0
        %v660 = vadd.f32 0.0, %v659
        %v661 = vpop.f32.mrb[0].mxu0
        %v662 = vadd.f32 0.0, %v661
        %663 = vmatprep.mubr.f32.mxu0 0.0
        %664 = vmatmul.mubr.f32.gmra.mrb[0].mxu0 %v453
        %v665 = vpop.f32.mrb[0].mxu0
        %v666 = vadd.f32 0.0, %v665
        %v667 = vpop.f32.mrb[0].mxu0
        %v668 = vadd.f32 0.0, %v667
        %669 = vmatprep.mubr.f32.mxu0 0.0
        %670 = vmatmul.mubr.f32.gmra.mrb[0].mxu0 %v456
        %v671 = vpop.f32.mrb[0].mxu0
        %v672 = vadd.f32 0.0, %v671
        %v673 = vpop.f32.mrb[0].mxu0
        %v674 = vadd.f32 0.0, %v673
        %675 = vmatprep.mubr.f32.mxu0 0.0
        %676 = vmatmul.mubr.f32.gmra.mrb[0].mxu0 %v459
        %v677 = vpop.f32.mrb[0].mxu0
        %v678 = vadd.f32 0.0, %v677
        %v679 = vpop.f32.mrb[0].mxu0
        %v680 = vadd.f32 0.0, %v679
        %681 = vmatprep.mubr.f32.mxu0 0.0
        %682 = vmatmul.mubr.f32.gmra.mrb[0].mxu0 %v462
        %v683 = vpop.f32.mrb[0].mxu0
        %v684 = vadd.f32 0.0, %v683
        %v685 = vpop.f32.mrb[0].mxu0
        %v686 = vadd.f32 0.0, %v685
        %687 = vmatprep.mubr.f32.mxu0 0.0
        %688 = vmatmul.mubr.f32.gmra.mrb[0].mxu0 %v465
        %v689 = vpop.f32.mrb[0].mxu0
        %v690 = vadd.f32 0.0, %v689
        %v691 = vpop.f32.mrb[0].mxu0
        %v692 = vadd.f32 0.0, %v691
        %693 = vmatprep.mubr.f32.mxu0 0.0
        %694 = vmatmul.mubr.f32.gmra.mrb[0].mxu0 %v468
        %v695 = vpop.f32.mrb[0].mxu0
        %v696 = vadd.f32 0.0, %v695
        %v697 = vpop.f32.mrb[0].mxu0
        %v698 = vadd.f32 0.0, %v697
        %699 = vmatprep.mubr.f32.mxu0 0.0
        %700 = vmatmul.mubr.f32.gmra.mrb[0].mxu0 %v471
        %v701 = vpop.f32.mrb[0].mxu0
        %v702 = vadd.f32 0.0, %v701
        %v703 = vpop.f32.mrb[0].mxu0
        %v704 = vadd.f32 0.0, %v703
        %705 = vmatprep.mubr.f32.mxu0 0.0
        %706 = vmatmul.mubr.f32.gmra.mrb[0].mxu0 %v474
        %v707 = vpop.f32.mrb[0].mxu0
        %v708 = vadd.f32 0.0, %v707
        %v709 = vpop.f32.mrb[0].mxu0
        %v710 = vadd.f32 0.0, %v709
        %711 = vmatprep.mubr.f32.mxu0 0.0
        %712 = vmatmul.mubr.f32.gmra.mrb[0].mxu0 %v477
        %v713 = vpop.f32.mrb[0].mxu0
        %v714 = vadd.f32 0.0, %v713
        %v715 = vpop.f32.mrb[0].mxu0
        %v716 = vadd.f32 0.0, %v715
        %717 = vmatprep.mubr.f32.mxu0 0.0
        %718 = vmatmul.mubr.f32.gmra.mrb[0].mxu0 %v480
        %v719 = vpop.f32.mrb[0].mxu0
        %v720 = vadd.f32 0.0, %v719
        %v721 = vpop.f32.mrb[0].mxu0
        %v722 = vadd.f32 0.0, %v721
        %723 = vmatprep.mubr.f32.mxu0 0.0
        %724 = vmatmul.mubr.f32.gmra.mrb[0].mxu0 %v483
        %v725 = vpop.f32.mrb[0].mxu0
        %v726 = vadd.f32 0.0, %v725
        %v727 = vpop.f32.mrb[0].mxu0
        %v728 = vadd.f32 0.0, %v727
        %729 = vmatprep.mubr.f32.mxu0 0.0
        %730 = vmatmul.mubr.f32.gmra.mrb[0].mxu0 %v486
        %v731 = vpop.f32.mrb[0].mxu0
        %v732 = vadd.f32 0.0, %v731
        %v733 = vpop.f32.mrb[0].mxu0
        %v734 = vadd.f32 0.0, %v733
        %735 = vmatprep.mubr.f32.mxu0 0.0
        %736 = vmatmul.mubr.f32.gmra.mrb[0].mxu0 %v489
        %v737 = vpop.f32.mrb[0].mxu0
        %v738 = vadd.f32 0.0, %v737
        %v739 = vpop.f32.mrb[0].mxu0
        %v740 = vadd.f32 0.0, %v739
        %741 = vmatprep.mubr.f32.mxu0 0.0
        %742 = vmatmul.mubr.f32.gmra.mrb[0].mxu0 %v492
        %v743 = vpop.f32.mrb[0].mxu0
        %v744 = vadd.f32 0.0, %v743
        %v745 = vpop.f32.mrb[0].mxu0
        %v746 = vadd.f32 0.0, %v745
        %747 = vmatprep.mubr.f32.mxu0 0.0
        %748 = vmatmul.mubr.f32.gmra.mrb[0].mxu0 %v495
        %v749 = vpop.f32.mrb[0].mxu0
        %v750 = vadd.f32 0.0, %v749
        %v751 = vpop.f32.mrb[0].mxu0
        %v752 = vadd.f32 0.0, %v751
        %753 = vdwg.mxu0
        %754 = vmatprep.subr.mxu0 %v323
        %755 = vmatpush1.msra.mxu0 %v322
        %756 = vmatprep.subr.mxu0 %v327
        %757 = vmatpush1.msra.mxu0 %v326
        %758 = vmatprep.subr.mxu0 %v331
        %759 = vmatpush1.msra.mxu0 %v330
        %760 = vmatprep.subr.mxu0 %v335
        %761 = vmatpush1.msra.mxu0 %v334
        %762 = vmatprep.subr.mxu0 0.0
        %763 = vmatpush1.msra.mxu0 0.0
        %764 = vmatprep.subr.mxu0 0.0
        %765 = vmatpush1.msra.mxu0 0.0
        %766 = vmatprep.subr.mxu0 0.0
        %767 = vmatpush1.msra.mxu0 0.0
        %768 = vmatprep.subr.mxu0 0.0
        %769 = vmatpush1.msra.mxu0 0.0
        %770 = vmatprep.subr.mxu0 0.0
        %771 = vmatpush1.msra.mxu0 0.0
        %772 = vmatprep.subr.mxu0 0.0
        %773 = vmatpush1.msra.mxu0 0.0
        %774 = vmatprep.subr.mxu0 0.0
        %775 = vmatpush1.msra.mxu0 0.0
        %776 = vmatprep.subr.mxu0 0.0
        %777 = vmatpush1.msra.mxu0 0.0
        %778 = vmatprep.subr.mxu0 0.0
        %779 = vmatpush1.msra.mxu0 0.0
        %780 = vmatprep.subr.mxu0 0.0
        %781 = vmatpush1.msra.mxu0 0.0
        %782 = vmatprep.subr.mxu0 0.0
        %783 = vmatpush1.msra.mxu0 0.0
        %784 = vmatprep.subr.mxu0 0.0
        %785 = vmatpush1.msra.mxu0 0.0
        %786 = vmatprep.subr.mxu0 0.0
        %787 = vmatpush1.msra.mxu0 0.0
        %788 = vmatprep.subr.mxu0 0.0
        %789 = vmatpush1.msra.mxu0 0.0
        %790 = vmatprep.subr.mxu0 0.0
        %791 = vmatpush1.msra.mxu0 0.0
        %792 = vmatprep.subr.mxu0 0.0
        %793 = vmatpush1.msra.mxu0 0.0
        %794 = vmatprep.subr.mxu0 0.0
        %795 = vmatpush1.msra.mxu0 0.0
        %796 = vmatprep.subr.mxu0 0.0
        %797 = vmatpush1.msra.mxu0 0.0
        %798 = vmatprep.subr.mxu0 0.0
        %799 = vmatpush1.msra.mxu0 0.0
        %800 = vmatprep.subr.mxu0 0.0
        %801 = vmatpush1.msra.mxu0 0.0
        %802 = vmatprep.subr.mxu0 0.0
        %803 = vmatpush1.msra.mxu0 0.0
        %804 = vmatprep.subr.mxu0 0.0
        %805 = vmatpush1.msra.mxu0 0.0
        %806 = vmatprep.subr.mxu0 0.0
        %807 = vmatpush1.msra.mxu0 0.0
        %808 = vmatprep.subr.mxu0 0.0
        %809 = vmatpush1.msra.mxu0 0.0
        %810 = vmatprep.subr.mxu0 0.0
        %811 = vmatpush1.msra.mxu0 0.0
        %812 = vmatprep.subr.mxu0 0.0
        %813 = vmatpush1.msra.mxu0 0.0
        %814 = vmatprep.subr.mxu0 0.0
        %815 = vmatpush1.msra.mxu0 0.0
        %816 = vmatprep.subr.mxu0 0.0
        %817 = vmatpush1.msra.mxu0 0.0
        %818 = vmatprep.mubr.f32.mxu0 0.0
        %819 = vmatmul.mubr.f32.gmra.mrb[0].mxu0 %v402
        %v820 = vpop.f32.mrb[0].mxu0
        %v821 = vadd.f32 0.0, %v820
        %v822 = vpop.f32.mrb[0].mxu0
        %v823 = vadd.f32 0.0, %v822
        %824 = vmatprep.mubr.f32.mxu0 0.0
        %825 = vmatmul.mubr.f32.gmra.mrb[0].mxu0 %v405
        %v826 = vpop.f32.mrb[0].mxu0
        %v827 = vadd.f32 0.0, %v826
        %v828 = vpop.f32.mrb[0].mxu0
        %v829 = vadd.f32 0.0, %v828
        %830 = vmatprep.mubr.f32.mxu0 0.0
        %831 = vmatmul.mubr.f32.gmra.mrb[0].mxu0 %v408
        %v832 = vpop.f32.mrb[0].mxu0
        %v833 = vadd.f32 0.0, %v832
        %v834 = vpop.f32.mrb[0].mxu0
        %v835 = vadd.f32 0.0, %v834
        %836 = vmatprep.mubr.f32.mxu0 0.0
        %837 = vmatmul.mubr.f32.gmra.mrb[0].mxu0 %v411
        %v838 = vpop.f32.mrb[0].mxu0
        %v839 = vadd.f32 0.0, %v838
        %v840 = vpop.f32.mrb[0].mxu0
        %v841 = vadd.f32 0.0, %v840
        %842 = vmatprep.mubr.f32.mxu0 0.0
        %843 = vmatmul.mubr.f32.gmra.mrb[0].mxu0 %v414
        %v844 = vpop.f32.mrb[0].mxu0
        %v845 = vadd.f32 0.0, %v844
        %v846 = vpop.f32.mrb[0].mxu0
        %v847 = vadd.f32 0.0, %v846
        %848 = vmatprep.mubr.f32.mxu0 0.0
        %849 = vmatmul.mubr.f32.gmra.mrb[0].mxu0 %v417
        %v850 = vpop.f32.mrb[0].mxu0
        %v851 = vadd.f32 0.0, %v850
        %v852 = vpop.f32.mrb[0].mxu0
        %v853 = vadd.f32 0.0, %v852
        %854 = vmatprep.mubr.f32.mxu0 0.0
        %855 = vmatmul.mubr.f32.gmra.mrb[0].mxu0 %v420
        %v856 = vpop.f32.mrb[0].mxu0
        %v857 = vadd.f32 0.0, %v856
        %v858 = vpop.f32.mrb[0].mxu0
        %v859 = vadd.f32 0.0, %v858
        %860 = vmatprep.mubr.f32.mxu0 0.0
        %861 = vmatmul.mubr.f32.gmra.mrb[0].mxu0 %v423
        %v862 = vpop.f32.mrb[0].mxu0
        %v863 = vadd.f32 0.0, %v862
        %v864 = vpop.f32.mrb[0].mxu0
        %v865 = vadd.f32 0.0, %v864
        %866 = vmatprep.mubr.f32.mxu0 0.0
        %867 = vmatmul.mubr.f32.gmra.mrb[0].mxu0 %v426
        %v868 = vpop.f32.mrb[0].mxu0
        %v869 = vadd.f32 0.0, %v868
        %v870 = vpop.f32.mrb[0].mxu0
        %v871 = vadd.f32 0.0, %v870
        %872 = vmatprep.mubr.f32.mxu0 0.0
        %873 = vmatmul.mubr.f32.gmra.mrb[0].mxu0 %v429
        %v874 = vpop.f32.mrb[0].mxu0
        %v875 = vadd.f32 0.0, %v874
        %v876 = vpop.f32.mrb[0].mxu0
        %v877 = vadd.f32 0.0, %v876
        %878 = vmatprep.mubr.f32.mxu0 0.0
        %879 = vmatmul.mubr.f32.gmra.mrb[0].mxu0 %v432
        %v880 = vpop.f32.mrb[0].mxu0
        %v881 = vadd.f32 0.0, %v880
        %v882 = vpop.f32.mrb[0].mxu0
        %v883 = vadd.f32 0.0, %v882
        %884 = vmatprep.mubr.f32.mxu0 0.0
        %885 = vmatmul.mubr.f32.gmra.mrb[0].mxu0 %v435
        %v886 = vpop.f32.mrb[0].mxu0
        %v887 = vadd.f32 0.0, %v886
        %v888 = vpop.f32.mrb[0].mxu0
        %v889 = vadd.f32 0.0, %v888
        %890 = vmatprep.mubr.f32.mxu0 0.0
        %891 = vmatmul.mubr.f32.gmra.mrb[0].mxu0 %v438
        %v892 = vpop.f32.mrb[0].mxu0
        %v893 = vadd.f32 0.0, %v892
        %v894 = vpop.f32.mrb[0].mxu0
        %v895 = vadd.f32 0.0, %v894
        %896 = vmatprep.mubr.f32.mxu0 0.0
        %897 = vmatmul.mubr.f32.gmra.mrb[0].mxu0 %v441
        %v898 = vpop.f32.mrb[0].mxu0
        %v899 = vadd.f32 0.0, %v898
        %v900 = vpop.f32.mrb[0].mxu0
        %v901 = vadd.f32 0.0, %v900
        %902 = vmatprep.mubr.f32.mxu0 0.0
        %903 = vmatmul.mubr.f32.gmra.mrb[0].mxu0 %v444
        %v904 = vpop.f32.mrb[0].mxu0
        %v905 = vadd.f32 0.0, %v904
        %v906 = vpop.f32.mrb[0].mxu0
        %v907 = vadd.f32 0.0, %v906
        %908 = vmatprep.mubr.f32.mxu0 0.0
        %909 = vmatmul.mubr.f32.gmra.mrb[0].mxu0 %v447
        %v910 = vpop.f32.mrb[0].mxu0
        %v911 = vadd.f32 0.0, %v910
        %v912 = vpop.f32.mrb[0].mxu0
        %v913 = vadd.f32 0.0, %v912
        %914 = vmatprep.mubr.f32.mxu0 0.0
        %915 = vmatmul.mubr.f32.gmra.mrb[0].mxu0 %v450
        %v916 = vpop.f32.mrb[0].mxu0
        %v917 = vadd.f32 0.0, %v916
        %v918 = vpop.f32.mrb[0].mxu0
        %v919 = vadd.f32 0.0, %v918
        %920 = vmatprep.mubr.f32.mxu0 0.0
        %921 = vmatmul.mubr.f32.gmra.mrb[0].mxu0 %v453
        %v922 = vpop.f32.mrb[0].mxu0
        %v923 = vadd.f32 0.0, %v922
        %v924 = vpop.f32.mrb[0].mxu0
        %v925 = vadd.f32 0.0, %v924
        %926 = vmatprep.mubr.f32.mxu0 0.0
        %927 = vmatmul.mubr.f32.gmra.mrb[0].mxu0 %v456
        %v928 = vpop.f32.mrb[0].mxu0
        %v929 = vadd.f32 0.0, %v928
        %v930 = vpop.f32.mrb[0].mxu0
        %v931 = vadd.f32 0.0, %v930
        %932 = vmatprep.mubr.f32.mxu0 0.0
        %933 = vmatmul.mubr.f32.gmra.mrb[0].mxu0 %v459
        %v934 = vpop.f32.mrb[0].mxu0
        %v935 = vadd.f32 0.0, %v934
        %v936 = vpop.f32.mrb[0].mxu0
        %v937 = vadd.f32 0.0, %v936
        %938 = vmatprep.mubr.f32.mxu0 0.0
        %939 = vmatmul.mubr.f32.gmra.mrb[0].mxu0 %v462
        %v940 = vpop.f32.mrb[0].mxu0
        %v941 = vadd.f32 0.0, %v940
        %v942 = vpop.f32.mrb[0].mxu0
        %v943 = vadd.f32 0.0, %v942
        %944 = vmatprep.mubr.f32.mxu0 0.0
        %945 = vmatmul.mubr.f32.gmra.mrb[0].mxu0 %v465
        %v946 = vpop.f32.mrb[0].mxu0
        %v947 = vadd.f32 0.0, %v946
        %v948 = vpop.f32.mrb[0].mxu0
        %v949 = vadd.f32 0.0, %v948
        %950 = vmatprep.mubr.f32.mxu0 0.0
        %951 = vmatmul.mubr.f32.gmra.mrb[0].mxu0 %v468
        %v952 = vpop.f32.mrb[0].mxu0
        %v953 = vadd.f32 0.0, %v952
        %v954 = vpop.f32.mrb[0].mxu0
        %v955 = vadd.f32 0.0, %v954
        %956 = vmatprep.mubr.f32.mxu0 0.0
        %957 = vmatmul.mubr.f32.gmra.mrb[0].mxu0 %v471
        %v958 = vpop.f32.mrb[0].mxu0
        %v959 = vadd.f32 0.0, %v958
        %v960 = vpop.f32.mrb[0].mxu0
        %v961 = vadd.f32 0.0, %v960
        %962 = vmatprep.mubr.f32.mxu0 0.0
        %963 = vmatmul.mubr.f32.gmra.mrb[0].mxu0 %v474
        %v964 = vpop.f32.mrb[0].mxu0
        %v965 = vadd.f32 0.0, %v964
        %v966 = vpop.f32.mrb[0].mxu0
        %v967 = vadd.f32 0.0, %v966
        %968 = vmatprep.mubr.f32.mxu0 0.0
        %969 = vmatmul.mubr.f32.gmra.mrb[0].mxu0 %v477
        %v970 = vpop.f32.mrb[0].mxu0
        %v971 = vadd.f32 0.0, %v970
        %v972 = vpop.f32.mrb[0].mxu0
        %v973 = vadd.f32 0.0, %v972
        %974 = vmatprep.mubr.f32.mxu0 0.0
        %975 = vmatmul.mubr.f32.gmra.mrb[0].mxu0 %v480
        %v976 = vpop.f32.mrb[0].mxu0
        %v977 = vadd.f32 0.0, %v976
        %v978 = vpop.f32.mrb[0].mxu0
        %v979 = vadd.f32 0.0, %v978
        %980 = vmatprep.mubr.f32.mxu0 0.0
        %981 = vmatmul.mubr.f32.gmra.mrb[0].mxu0 %v483
        %v982 = vpop.f32.mrb[0].mxu0
        %v983 = vadd.f32 0.0, %v982
        %v984 = vpop.f32.mrb[0].mxu0
        %v985 = vadd.f32 0.0, %v984
        %986 = vmatprep.mubr.f32.mxu0 0.0
        %987 = vmatmul.mubr.f32.gmra.mrb[0].mxu0 %v486
        %v988 = vpop.f32.mrb[0].mxu0
        %v989 = vadd.f32 0.0, %v988
        %v990 = vpop.f32.mrb[0].mxu0
        %v991 = vadd.f32 0.0, %v990
        %992 = vmatprep.mubr.f32.mxu0 0.0
        %993 = vmatmul.mubr.f32.gmra.mrb[0].mxu0 %v489
        %v994 = vpop.f32.mrb[0].mxu0
        %v995 = vadd.f32 0.0, %v994
        %v996 = vpop.f32.mrb[0].mxu0
        %v997 = vadd.f32 0.0, %v996
        %998 = vmatprep.mubr.f32.mxu0 0.0
        %999 = vmatmul.mubr.f32.gmra.mrb[0].mxu0 %v492
        %v1000 = vpop.f32.mrb[0].mxu0
        %v1001 = vadd.f32 0.0, %v1000
        %v1002 = vpop.f32.mrb[0].mxu0
        %v1003 = vadd.f32 0.0, %v1002
        %1004 = vmatprep.mubr.f32.mxu0 0.0
        %1005 = vmatmul.mubr.f32.gmra.mrb[0].mxu0 %v495
        %v1006 = vpop.f32.mrb[0].mxu0
        %v1007 = vadd.f32 0.0, %v1006
        %v1008 = vpop.f32.mrb[0].mxu0
        %v1009 = vadd.f32 0.0, %v1008
        %1010 = vdwg.mxu0
        %v1011 = vld [vmem:[%s296] sm:$0xff]
        %v1012 = vld [vmem:[%s296 + $0x8] sm:$0xff]
        %v1013 = vld [vmem:[%s296 + $0x10] sm:$0xff]
        %v1014 = vld [vmem:[%s296 + $0x18] sm:$0xff]
        %v1015 = vld [vmem:[%s296 + $0x20] sm:$0xff]
        %v1016 = vld [vmem:[%s296 + $0x28] sm:$0xff]
        %v1017 = vld [vmem:[%s296 + $0x30] sm:$0xff]
        %v1018 = vld [vmem:[%s296 + $0x38] sm:$0xff]
        %v1019 = vld [vmem:[%s296 + $0x40] sm:$0xff]
        %v1020 = vld [vmem:[%s296 + $0x48] sm:$0xff]
        %v1021 = vld [vmem:[%s296 + $0x50] sm:$0xff]
        %v1022 = vld [vmem:[%s296 + $0x58] sm:$0xff]
        %v1023 = vld [vmem:[%s296 + $0x60] sm:$0xff]
        %v1024 = vld [vmem:[%s296 + $0x68] sm:$0xff]
        %v1025 = vld [vmem:[%s296 + $0x70] sm:$0xff]
        %v1026 = vld [vmem:[%s296 + $0x78] sm:$0xff]
        %v1027 = vld [vmem:[%s296 + $0x80] sm:$0xff]
        %v1028 = vld [vmem:[%s296 + $0x88] sm:$0xff]
        %v1029 = vld [vmem:[%s296 + $0x90] sm:$0xff]
        %v1030 = vld [vmem:[%s296 + $0x98] sm:$0xff]
        %v1031 = vld [vmem:[%s296 + $0xa0] sm:$0xff]
        %v1032 = vld [vmem:[%s296 + $0xa8] sm:$0xff]
        %v1033 = vld [vmem:[%s296 + $0xb0] sm:$0xff]
        %v1034 = vld [vmem:[%s296 + $0xb8] sm:$0xff]
        %v1035 = vld [vmem:[%s296 + $0xc0] sm:$0xff]
        %v1036 = vld [vmem:[%s296 + $0xc8] sm:$0xff]
        %v1037 = vld [vmem:[%s296 + $0xd0] sm:$0xff]
        %v1038 = vld [vmem:[%s296 + $0xd8] sm:$0xff]
        %v1039 = vld [vmem:[%s296 + $0xe0] sm:$0xff]
        %v1040 = vld [vmem:[%s296 + $0xe8] sm:$0xff]
        %v1041 = vld [vmem:[%s296 + $0xf0] sm:$0xff]
        %v1042 = vld [vmem:[%s296 + $0xf8] sm:$0xff]
        %v1043 = vld [vmem:[%s301] sm:$0xf]
        %1045 = vset.pattern.permute.xlu0 0
        %1046 = vperm.xlu0 %1045, %v1011
        %v1047 = vpop.permute.xlu0 %1046
        %1050 = vset.pattern.permute.xlu0 0
        %1051 = vperm.xlu0 %1050, %v1012
        %v1052 = vpop.permute.xlu0 %1051
        %1055 = vset.pattern.permute.xlu0 0
        %1056 = vperm.xlu0 %1055, %v1013
        %v1057 = vpop.permute.xlu0 %1056
        %1060 = vset.pattern.permute.xlu0 0
        %1061 = vperm.xlu0 %1060, %v1014
        %v1062 = vpop.permute.xlu0 %1061
        %1065 = vset.pattern.permute.xlu0 0
        %1066 = vperm.xlu0 %1065, %v1015
        %v1067 = vpop.permute.xlu0 %1066
        %1070 = vset.pattern.permute.xlu0 0
        %1071 = vperm.xlu0 %1070, %v1016
        %v1072 = vpop.permute.xlu0 %1071
        %1075 = vset.pattern.permute.xlu0 0
        %1076 = vperm.xlu0 %1075, %v1017
        %v1077 = vpop.permute.xlu0 %1076
        %1080 = vset.pattern.permute.xlu0 0
        %1081 = vperm.xlu0 %1080, %v1018
        %v1082 = vpop.permute.xlu0 %1081
        %1085 = vset.pattern.permute.xlu0 0
        %1086 = vperm.xlu0 %1085, %v1019
        %v1087 = vpop.permute.xlu0 %1086
        %1090 = vset.pattern.permute.xlu0 0
        %1091 = vperm.xlu0 %1090, %v1020
        %v1092 = vpop.permute.xlu0 %1091
        %1095 = vset.pattern.permute.xlu0 0
        %1096 = vperm.xlu0 %1095, %v1021
        %v1097 = vpop.permute.xlu0 %1096
        %1100 = vset.pattern.permute.xlu0 0
        %1101 = vperm.xlu0 %1100, %v1022
        %v1102 = vpop.permute.xlu0 %1101
        %1105 = vset.pattern.permute.xlu0 0
        %1106 = vperm.xlu0 %1105, %v1023
        %v1107 = vpop.permute.xlu0 %1106
        %1110 = vset.pattern.permute.xlu0 0
        %1111 = vperm.xlu0 %1110, %v1024
        %v1112 = vpop.permute.xlu0 %1111
        %1115 = vset.pattern.permute.xlu0 0
        %1116 = vperm.xlu0 %1115, %v1025
        %v1117 = vpop.permute.xlu0 %1116
        %1120 = vset.pattern.permute.xlu0 0
        %1121 = vperm.xlu0 %1120, %v1026
        %v1122 = vpop.permute.xlu0 %1121
        %1125 = vset.pattern.permute.xlu0 0
        %1126 = vperm.xlu0 %1125, %v1027
        %v1127 = vpop.permute.xlu0 %1126
        %1130 = vset.pattern.permute.xlu0 0
        %1131 = vperm.xlu0 %1130, %v1028
        %v1132 = vpop.permute.xlu0 %1131
        %1135 = vset.pattern.permute.xlu0 0
        %1136 = vperm.xlu0 %1135, %v1029
        %v1137 = vpop.permute.xlu0 %1136
        %1140 = vset.pattern.permute.xlu0 0
        %1141 = vperm.xlu0 %1140, %v1030
        %v1142 = vpop.permute.xlu0 %1141
        %1145 = vset.pattern.permute.xlu0 0
        %1146 = vperm.xlu0 %1145, %v1031
        %v1147 = vpop.permute.xlu0 %1146
        %1150 = vset.pattern.permute.xlu0 0
        %1151 = vperm.xlu0 %1150, %v1032
        %v1152 = vpop.permute.xlu0 %1151
        %1155 = vset.pattern.permute.xlu0 0
        %1156 = vperm.xlu0 %1155, %v1033
        %v1157 = vpop.permute.xlu0 %1156
        %1160 = vset.pattern.permute.xlu0 0
        %1161 = vperm.xlu0 %1160, %v1034
        %v1162 = vpop.permute.xlu0 %1161
        %1165 = vset.pattern.permute.xlu0 0
        %1166 = vperm.xlu0 %1165, %v1035
        %v1167 = vpop.permute.xlu0 %1166
        %1170 = vset.pattern.permute.xlu0 0
        %1171 = vperm.xlu0 %1170, %v1036
        %v1172 = vpop.permute.xlu0 %1171
        %1175 = vset.pattern.permute.xlu0 0
        %1176 = vperm.xlu0 %1175, %v1037
        %v1177 = vpop.permute.xlu0 %1176
        %1180 = vset.pattern.permute.xlu0 0
        %1181 = vperm.xlu0 %1180, %v1038
        %v1182 = vpop.permute.xlu0 %1181
        %1185 = vset.pattern.permute.xlu0 0
        %1186 = vperm.xlu0 %1185, %v1039
        %v1187 = vpop.permute.xlu0 %1186
        %1190 = vset.pattern.permute.xlu0 0
        %1191 = vperm.xlu0 %1190, %v1040
        %v1192 = vpop.permute.xlu0 %1191
        %1195 = vset.pattern.permute.xlu0 0
        %1196 = vperm.xlu0 %1195, %v1041
        %v1197 = vpop.permute.xlu0 %1196
        %1200 = vset.pattern.permute.xlu0 0
        %1201 = vperm.xlu0 %1200, %v1042
        %v1202 = vpop.permute.xlu0 %1201
        %v1205 = vlaneseq
        %v1206 = vshrl.u32 %v1205, 7
        %v1207 = vsub.s32 0, %v1206
        %v1208 = vrot.slane %v1043, %v1207
        %v1209 = vlaneseq
        %v1210 = vshrl.u32 %v1209, 7
        %v1211 = vsub.s32 1, %v1210
        %v1212 = vrot.slane %v1043, %v1211
        %v1213 = vlaneseq
        %v1214 = vshrl.u32 %v1213, 7
        %v1215 = vsub.s32 2, %v1214
        %v1216 = vrot.slane %v1043, %v1215
        %v1217 = vlaneseq
        %v1218 = vshrl.u32 %v1217, 7
        %v1219 = vsub.s32 3, %v1218
        %v1220 = vrot.slane %v1043, %v1219
        %v1225 = vadd.f32 %v1047, %v1208
        %v1226 = vadd.f32 %v1047, %v1212
        %v1227 = vadd.f32 %v1047, %v1216
        %v1228 = vadd.f32 %v1047, %v1220
        %v1229 = vadd.f32 %v1052, %v1208
        %v1230 = vadd.f32 %v1052, %v1212
        %v1231 = vadd.f32 %v1052, %v1216
        %v1232 = vadd.f32 %v1052, %v1220
        %v1233 = vadd.f32 %v1057, %v1208
        %v1234 = vadd.f32 %v1057, %v1212
        %v1235 = vadd.f32 %v1057, %v1216
        %v1236 = vadd.f32 %v1057, %v1220
        %v1237 = vadd.f32 %v1062, %v1208
        %v1238 = vadd.f32 %v1062, %v1212
        %v1239 = vadd.f32 %v1062, %v1216
        %v1240 = vadd.f32 %v1062, %v1220
        %v1241 = vadd.f32 %v1067, %v1208
        %v1242 = vadd.f32 %v1067, %v1212
        %v1243 = vadd.f32 %v1067, %v1216
        %v1244 = vadd.f32 %v1067, %v1220
        %v1245 = vadd.f32 %v1072, %v1208
        %v1246 = vadd.f32 %v1072, %v1212
        %v1247 = vadd.f32 %v1072, %v1216
        %v1248 = vadd.f32 %v1072, %v1220
        %v1249 = vadd.f32 %v1077, %v1208
        %v1250 = vadd.f32 %v1077, %v1212
        %v1251 = vadd.f32 %v1077, %v1216
        %v1252 = vadd.f32 %v1077, %v1220
        %v1253 = vadd.f32 %v1082, %v1208
        %v1254 = vadd.f32 %v1082, %v1212
        %v1255 = vadd.f32 %v1082, %v1216
        %v1256 = vadd.f32 %v1082, %v1220
        %v1257 = vadd.f32 %v1087, %v1208
        %v1258 = vadd.f32 %v1087, %v1212
        %v1259 = vadd.f32 %v1087, %v1216
        %v1260 = vadd.f32 %v1087, %v1220
        %v1261 = vadd.f32 %v1092, %v1208
        %v1262 = vadd.f32 %v1092, %v1212
        %v1263 = vadd.f32 %v1092, %v1216
        %v1264 = vadd.f32 %v1092, %v1220
        %v1265 = vadd.f32 %v1097, %v1208
        %v1266 = vadd.f32 %v1097, %v1212
        %v1267 = vadd.f32 %v1097, %v1216
        %v1268 = vadd.f32 %v1097, %v1220
        %v1269 = vadd.f32 %v1102, %v1208
        %v1270 = vadd.f32 %v1102, %v1212
        %v1271 = vadd.f32 %v1102, %v1216
        %v1272 = vadd.f32 %v1102, %v1220
        %v1273 = vadd.f32 %v1107, %v1208
        %v1274 = vadd.f32 %v1107, %v1212
        %v1275 = vadd.f32 %v1107, %v1216
        %v1276 = vadd.f32 %v1107, %v1220
        %v1277 = vadd.f32 %v1112, %v1208
        %v1278 = vadd.f32 %v1112, %v1212
        %v1279 = vadd.f32 %v1112, %v1216
        %v1280 = vadd.f32 %v1112, %v1220
        %v1281 = vadd.f32 %v1117, %v1208
        %v1282 = vadd.f32 %v1117, %v1212
        %v1283 = vadd.f32 %v1117, %v1216
        %v1284 = vadd.f32 %v1117, %v1220
        %v1285 = vadd.f32 %v1122, %v1208
        %v1286 = vadd.f32 %v1122, %v1212
        %v1287 = vadd.f32 %v1122, %v1216
        %v1288 = vadd.f32 %v1122, %v1220
        %v1289 = vadd.f32 %v1127, %v1208
        %v1290 = vadd.f32 %v1127, %v1212
        %v1291 = vadd.f32 %v1127, %v1216
        %v1292 = vadd.f32 %v1127, %v1220
        %v1293 = vadd.f32 %v1132, %v1208
        %v1294 = vadd.f32 %v1132, %v1212
        %v1295 = vadd.f32 %v1132, %v1216
        %v1296 = vadd.f32 %v1132, %v1220
        %v1297 = vadd.f32 %v1137, %v1208
        %v1298 = vadd.f32 %v1137, %v1212
        %v1299 = vadd.f32 %v1137, %v1216
        %v1300 = vadd.f32 %v1137, %v1220
        %v1301 = vadd.f32 %v1142, %v1208
        %v1302 = vadd.f32 %v1142, %v1212
        %v1303 = vadd.f32 %v1142, %v1216
        %v1304 = vadd.f32 %v1142, %v1220
        %v1305 = vadd.f32 %v1147, %v1208
        %v1306 = vadd.f32 %v1147, %v1212
        %v1307 = vadd.f32 %v1147, %v1216
        %v1308 = vadd.f32 %v1147, %v1220
        %v1309 = vadd.f32 %v1152, %v1208
        %v1310 = vadd.f32 %v1152, %v1212
        %v1311 = vadd.f32 %v1152, %v1216
        %v1312 = vadd.f32 %v1152, %v1220
        %v1313 = vadd.f32 %v1157, %v1208
        %v1314 = vadd.f32 %v1157, %v1212
        %v1315 = vadd.f32 %v1157, %v1216
        %v1316 = vadd.f32 %v1157, %v1220
        %v1317 = vadd.f32 %v1162, %v1208
        %v1318 = vadd.f32 %v1162, %v1212
        %v1319 = vadd.f32 %v1162, %v1216
        %v1320 = vadd.f32 %v1162, %v1220
        %v1321 = vadd.f32 %v1167, %v1208
        %v1322 = vadd.f32 %v1167, %v1212
        %v1323 = vadd.f32 %v1167, %v1216
        %v1324 = vadd.f32 %v1167, %v1220
        %v1325 = vadd.f32 %v1172, %v1208
        %v1326 = vadd.f32 %v1172, %v1212
        %v1327 = vadd.f32 %v1172, %v1216
        %v1328 = vadd.f32 %v1172, %v1220
        %v1329 = vadd.f32 %v1177, %v1208
        %v1330 = vadd.f32 %v1177, %v1212
        %v1331 = vadd.f32 %v1177, %v1216
        %v1332 = vadd.f32 %v1177, %v1220
        %v1333 = vadd.f32 %v1182, %v1208
        %v1334 = vadd.f32 %v1182, %v1212
        %v1335 = vadd.f32 %v1182, %v1216
        %v1336 = vadd.f32 %v1182, %v1220
        %v1337 = vadd.f32 %v1187, %v1208
        %v1338 = vadd.f32 %v1187, %v1212
        %v1339 = vadd.f32 %v1187, %v1216
        %v1340 = vadd.f32 %v1187, %v1220
        %v1341 = vadd.f32 %v1192, %v1208
        %v1342 = vadd.f32 %v1192, %v1212
        %v1343 = vadd.f32 %v1192, %v1216
        %v1344 = vadd.f32 %v1192, %v1220
        %v1345 = vadd.f32 %v1197, %v1208
        %v1346 = vadd.f32 %v1197, %v1212
        %v1347 = vadd.f32 %v1197, %v1216
        %v1348 = vadd.f32 %v1197, %v1220
        %v1349 = vadd.f32 %v1202, %v1208
        %v1350 = vadd.f32 %v1202, %v1212
        %v1351 = vadd.f32 %v1202, %v1216
        %v1352 = vadd.f32 %v1202, %v1220
        %v1353 = vmul.f32 %v564, 2.0
        %v1354 = vmul.f32 %v566, 2.0
        %v1355 = vmul.f32 %v821, 2.0
        %v1356 = vmul.f32 %v823, 2.0
        %v1357 = vmul.f32 %v570, 2.0
        %v1358 = vmul.f32 %v572, 2.0
        %v1359 = vmul.f32 %v827, 2.0
        %v1360 = vmul.f32 %v829, 2.0
        %v1361 = vmul.f32 %v576, 2.0
        %v1362 = vmul.f32 %v578, 2.0
        %v1363 = vmul.f32 %v833, 2.0
        %v1364 = vmul.f32 %v835, 2.0
        %v1365 = vmul.f32 %v582, 2.0
        %v1366 = vmul.f32 %v584, 2.0
        %v1367 = vmul.f32 %v839, 2.0
        %v1368 = vmul.f32 %v841, 2.0
        %v1369 = vmul.f32 %v588, 2.0
        %v1370 = vmul.f32 %v590, 2.0
        %v1371 = vmul.f32 %v845, 2.0
        %v1372 = vmul.f32 %v847, 2.0
        %v1373 = vmul.f32 %v594, 2.0
        %v1374 = vmul.f32 %v596, 2.0
        %v1375 = vmul.f32 %v851, 2.0
        %v1376 = vmul.f32 %v853, 2.0
        %v1377 = vmul.f32 %v600, 2.0
        %v1378 = vmul.f32 %v602, 2.0
        %v1379 = vmul.f32 %v857, 2.0
        %v1380 = vmul.f32 %v859, 2.0
        %v1381 = vmul.f32 %v606, 2.0
        %v1382 = vmul.f32 %v608, 2.0
        %v1383 = vmul.f32 %v863, 2.0
        %v1384 = vmul.f32 %v865, 2.0
        %v1385 = vmul.f32 %v612, 2.0
        %v1386 = vmul.f32 %v614, 2.0
        %v1387 = vmul.f32 %v869, 2.0
        %v1388 = vmul.f32 %v871, 2.0
        %v1389 = vmul.f32 %v618, 2.0
        %v1390 = vmul.f32 %v620, 2.0
        %v1391 = vmul.f32 %v875, 2.0
        %v1392 = vmul.f32 %v877, 2.0
        %v1393 = vmul.f32 %v624, 2.0
        %v1394 = vmul.f32 %v626, 2.0
        %v1395 = vmul.f32 %v881, 2.0
        %v1396 = vmul.f32 %v883, 2.0
        %v1397 = vmul.f32 %v630, 2.0
        %v1398 = vmul.f32 %v632, 2.0
        %v1399 = vmul.f32 %v887, 2.0
        %v1400 = vmul.f32 %v889, 2.0
        %v1401 = vmul.f32 %v636, 2.0
        %v1402 = vmul.f32 %v638, 2.0
        %v1403 = vmul.f32 %v893, 2.0
        %v1404 = vmul.f32 %v895, 2.0
        %v1405 = vmul.f32 %v642, 2.0
        %v1406 = vmul.f32 %v644, 2.0
        %v1407 = vmul.f32 %v899, 2.0
        %v1408 = vmul.f32 %v901, 2.0
        %v1409 = vmul.f32 %v648, 2.0
        %v1410 = vmul.f32 %v650, 2.0
        %v1411 = vmul.f32 %v905, 2.0
        %v1412 = vmul.f32 %v907, 2.0
        %v1413 = vmul.f32 %v654, 2.0
        %v1414 = vmul.f32 %v656, 2.0
        %v1415 = vmul.f32 %v911, 2.0
        %v1416 = vmul.f32 %v913, 2.0
        %v1417 = vmul.f32 %v660, 2.0
        %v1418 = vmul.f32 %v662, 2.0
        %v1419 = vmul.f32 %v917, 2.0
        %v1420 = vmul.f32 %v919, 2.0
        %v1421 = vmul.f32 %v666, 2.0
        %v1422 = vmul.f32 %v668, 2.0
        %v1423 = vmul.f32 %v923, 2.0
        %v1424 = vmul.f32 %v925, 2.0
        %v1425 = vmul.f32 %v672, 2.0
        %v1426 = vmul.f32 %v674, 2.0
        %v1427 = vmul.f32 %v929, 2.0
        %v1428 = vmul.f32 %v931, 2.0
        %v1429 = vmul.f32 %v678, 2.0
        %v1430 = vmul.f32 %v680, 2.0
        %v1431 = vmul.f32 %v935, 2.0
        %v1432 = vmul.f32 %v937, 2.0
        %v1433 = vmul.f32 %v684, 2.0
        %v1434 = vmul.f32 %v686, 2.0
        %v1435 = vmul.f32 %v941, 2.0
        %v1436 = vmul.f32 %v943, 2.0
        %v1437 = vmul.f32 %v690, 2.0
        %v1438 = vmul.f32 %v692, 2.0
        %v1439 = vmul.f32 %v947, 2.0
        %v1440 = vmul.f32 %v949, 2.0
        %v1441 = vmul.f32 %v696, 2.0
        %v1442 = vmul.f32 %v698, 2.0
        %v1443 = vmul.f32 %v953, 2.0
        %v1444 = vmul.f32 %v955, 2.0
        %v1445 = vmul.f32 %v702, 2.0
        %v1446 = vmul.f32 %v704, 2.0
        %v1447 = vmul.f32 %v959, 2.0
        %v1448 = vmul.f32 %v961, 2.0
        %v1449 = vmul.f32 %v708, 2.0
        %v1450 = vmul.f32 %v710, 2.0
        %v1451 = vmul.f32 %v965, 2.0
        %v1452 = vmul.f32 %v967, 2.0
        %v1453 = vmul.f32 %v714, 2.0
        %v1454 = vmul.f32 %v716, 2.0
        %v1455 = vmul.f32 %v971, 2.0
        %v1456 = vmul.f32 %v973, 2.0
        %v1457 = vmul.f32 %v720, 2.0
        %v1458 = vmul.f32 %v722, 2.0
        %v1459 = vmul.f32 %v977, 2.0
        %v1460 = vmul.f32 %v979, 2.0
        %v1461 = vmul.f32 %v726, 2.0
        %v1462 = vmul.f32 %v728, 2.0
        %v1463 = vmul.f32 %v983, 2.0
        %v1464 = vmul.f32 %v985, 2.0
        %v1465 = vmul.f32 %v732, 2.0
        %v1466 = vmul.f32 %v734, 2.0
        %v1467 = vmul.f32 %v989, 2.0
        %v1468 = vmul.f32 %v991, 2.0
        %v1469 = vmul.f32 %v738, 2.0
        %v1470 = vmul.f32 %v740, 2.0
        %v1471 = vmul.f32 %v995, 2.0
        %v1472 = vmul.f32 %v997, 2.0
        %v1473 = vmul.f32 %v744, 2.0
        %v1474 = vmul.f32 %v746, 2.0
        %v1475 = vmul.f32 %v1001, 2.0
        %v1476 = vmul.f32 %v1003, 2.0
        %v1477 = vmul.f32 %v750, 2.0
        %v1478 = vmul.f32 %v752, 2.0
        %v1479 = vmul.f32 %v1007, 2.0
        %v1480 = vmul.f32 %v1009, 2.0
        %v1481 = vsub.f32 %v1225, %v1353
        %v1482 = vsub.f32 %v1226, %v1354
        %v1483 = vsub.f32 %v1227, %v1355
        %v1484 = vsub.f32 %v1228, %v1356
        %v1485 = vsub.f32 %v1229, %v1357
        %v1486 = vsub.f32 %v1230, %v1358
        %v1487 = vsub.f32 %v1231, %v1359
        %v1488 = vsub.f32 %v1232, %v1360
        %v1489 = vsub.f32 %v1233, %v1361
        %v1490 = vsub.f32 %v1234, %v1362
        %v1491 = vsub.f32 %v1235, %v1363
        %v1492 = vsub.f32 %v1236, %v1364
        %v1493 = vsub.f32 %v1237, %v1365
        %v1494 = vsub.f32 %v1238, %v1366
        %v1495 = vsub.f32 %v1239, %v1367
        %v1496 = vsub.f32 %v1240, %v1368
        %v1497 = vsub.f32 %v1241, %v1369
        %v1498 = vsub.f32 %v1242, %v1370
        %v1499 = vsub.f32 %v1243, %v1371
        %v1500 = vsub.f32 %v1244, %v1372
        %v1501 = vsub.f32 %v1245, %v1373
        %v1502 = vsub.f32 %v1246, %v1374
        %v1503 = vsub.f32 %v1247, %v1375
        %v1504 = vsub.f32 %v1248, %v1376
        %v1505 = vsub.f32 %v1249, %v1377
        %v1506 = vsub.f32 %v1250, %v1378
        %v1507 = vsub.f32 %v1251, %v1379
        %v1508 = vsub.f32 %v1252, %v1380
        %v1509 = vsub.f32 %v1253, %v1381
        %v1510 = vsub.f32 %v1254, %v1382
        %v1511 = vsub.f32 %v1255, %v1383
        %v1512 = vsub.f32 %v1256, %v1384
        %v1513 = vsub.f32 %v1257, %v1385
        %v1514 = vsub.f32 %v1258, %v1386
        %v1515 = vsub.f32 %v1259, %v1387
        %v1516 = vsub.f32 %v1260, %v1388
        %v1517 = vsub.f32 %v1261, %v1389
        %v1518 = vsub.f32 %v1262, %v1390
        %v1519 = vsub.f32 %v1263, %v1391
        %v1520 = vsub.f32 %v1264, %v1392
        %v1521 = vsub.f32 %v1265, %v1393
        %v1522 = vsub.f32 %v1266, %v1394
        %v1523 = vsub.f32 %v1267, %v1395
        %v1524 = vsub.f32 %v1268, %v1396
        %v1525 = vsub.f32 %v1269, %v1397
        %v1526 = vsub.f32 %v1270, %v1398
        %v1527 = vsub.f32 %v1271, %v1399
        %v1528 = vsub.f32 %v1272, %v1400
        %v1529 = vsub.f32 %v1273, %v1401
        %v1530 = vsub.f32 %v1274, %v1402
        %v1531 = vsub.f32 %v1275, %v1403
        %v1532 = vsub.f32 %v1276, %v1404
        %v1533 = vsub.f32 %v1277, %v1405
        %v1534 = vsub.f32 %v1278, %v1406
        %v1535 = vsub.f32 %v1279, %v1407
        %v1536 = vsub.f32 %v1280, %v1408
        %v1537 = vsub.f32 %v1281, %v1409
        %v1538 = vsub.f32 %v1282, %v1410
        %v1539 = vsub.f32 %v1283, %v1411
        %v1540 = vsub.f32 %v1284, %v1412
        %v1541 = vsub.f32 %v1285, %v1413
        %v1542 = vsub.f32 %v1286, %v1414
        %v1543 = vsub.f32 %v1287, %v1415
        %v1544 = vsub.f32 %v1288, %v1416
        %v1545 = vsub.f32 %v1289, %v1417
        %v1546 = vsub.f32 %v1290, %v1418
        %v1547 = vsub.f32 %v1291, %v1419
        %v1548 = vsub.f32 %v1292, %v1420
        %v1549 = vsub.f32 %v1293, %v1421
        %v1550 = vsub.f32 %v1294, %v1422
        %v1551 = vsub.f32 %v1295, %v1423
        %v1552 = vsub.f32 %v1296, %v1424
        %v1553 = vsub.f32 %v1297, %v1425
        %v1554 = vsub.f32 %v1298, %v1426
        %v1555 = vsub.f32 %v1299, %v1427
        %v1556 = vsub.f32 %v1300, %v1428
        %v1557 = vsub.f32 %v1301, %v1429
        %v1558 = vsub.f32 %v1302, %v1430
        %v1559 = vsub.f32 %v1303, %v1431
        %v1560 = vsub.f32 %v1304, %v1432
        %v1561 = vsub.f32 %v1305, %v1433
        %v1562 = vsub.f32 %v1306, %v1434
        %v1563 = vsub.f32 %v1307, %v1435
        %v1564 = vsub.f32 %v1308, %v1436
        %v1565 = vsub.f32 %v1309, %v1437
        %v1566 = vsub.f32 %v1310, %v1438
        %v1567 = vsub.f32 %v1311, %v1439
        %v1568 = vsub.f32 %v1312, %v1440
        %v1569 = vsub.f32 %v1313, %v1441
        %v1570 = vsub.f32 %v1314, %v1442
        %v1571 = vsub.f32 %v1315, %v1443
        %v1572 = vsub.f32 %v1316, %v1444
        %v1573 = vsub.f32 %v1317, %v1445
        %v1574 = vsub.f32 %v1318, %v1446
        %v1575 = vsub.f32 %v1319, %v1447
        %v1576 = vsub.f32 %v1320, %v1448
        %v1577 = vsub.f32 %v1321, %v1449
        %v1578 = vsub.f32 %v1322, %v1450
        %v1579 = vsub.f32 %v1323, %v1451
        %v1580 = vsub.f32 %v1324, %v1452
        %v1581 = vsub.f32 %v1325, %v1453
        %v1582 = vsub.f32 %v1326, %v1454
        %v1583 = vsub.f32 %v1327, %v1455
        %v1584 = vsub.f32 %v1328, %v1456
        %v1585 = vsub.f32 %v1329, %v1457
        %v1586 = vsub.f32 %v1330, %v1458
        %v1587 = vsub.f32 %v1331, %v1459
        %v1588 = vsub.f32 %v1332, %v1460
        %v1589 = vsub.f32 %v1333, %v1461
        %v1590 = vsub.f32 %v1334, %v1462
        %v1591 = vsub.f32 %v1335, %v1463
        %v1592 = vsub.f32 %v1336, %v1464
        %v1593 = vsub.f32 %v1337, %v1465
        %v1594 = vsub.f32 %v1338, %v1466
        %v1595 = vsub.f32 %v1339, %v1467
        %v1596 = vsub.f32 %v1340, %v1468
        %v1597 = vsub.f32 %v1341, %v1469
        %v1598 = vsub.f32 %v1342, %v1470
        %v1599 = vsub.f32 %v1343, %v1471
        %v1600 = vsub.f32 %v1344, %v1472
        %v1601 = vsub.f32 %v1345, %v1473
        %v1602 = vsub.f32 %v1346, %v1474
        %v1603 = vsub.f32 %v1347, %v1475
        %v1604 = vsub.f32 %v1348, %v1476
        %v1605 = vsub.f32 %v1349, %v1477
        %v1606 = vsub.f32 %v1350, %v1478
        %v1607 = vsub.f32 %v1351, %v1479
        %v1608 = vsub.f32 %v1352, %v1480
        %v1609 = vmax.f32 %v1481, 1e-30
        %v1610 = vmax.f32 %v1482, 1e-30
        %v1611 = vmax.f32 %v1483, 1e-30
        %v1612 = vmax.f32 %v1484, 1e-30
        %v1613 = vmax.f32 %v1485, 1e-30
        %v1614 = vmax.f32 %v1486, 1e-30
        %v1615 = vmax.f32 %v1487, 1e-30
        %v1616 = vmax.f32 %v1488, 1e-30
        %v1617 = vmax.f32 %v1489, 1e-30
        %v1618 = vmax.f32 %v1490, 1e-30
        %v1619 = vmax.f32 %v1491, 1e-30
        %v1620 = vmax.f32 %v1492, 1e-30
        %v1621 = vmax.f32 %v1493, 1e-30
        %v1622 = vmax.f32 %v1494, 1e-30
        %v1623 = vmax.f32 %v1495, 1e-30
        %v1624 = vmax.f32 %v1496, 1e-30
        %v1625 = vmax.f32 %v1497, 1e-30
        %v1626 = vmax.f32 %v1498, 1e-30
        %v1627 = vmax.f32 %v1499, 1e-30
        %v1628 = vmax.f32 %v1500, 1e-30
        %v1629 = vmax.f32 %v1501, 1e-30
        %v1630 = vmax.f32 %v1502, 1e-30
        %v1631 = vmax.f32 %v1503, 1e-30
        %v1632 = vmax.f32 %v1504, 1e-30
        %v1633 = vmax.f32 %v1505, 1e-30
        %v1634 = vmax.f32 %v1506, 1e-30
        %v1635 = vmax.f32 %v1507, 1e-30
        %v1636 = vmax.f32 %v1508, 1e-30
        %v1637 = vmax.f32 %v1509, 1e-30
        %v1638 = vmax.f32 %v1510, 1e-30
        %v1639 = vmax.f32 %v1511, 1e-30
        %v1640 = vmax.f32 %v1512, 1e-30
        %v1641 = vmax.f32 %v1513, 1e-30
        %v1642 = vmax.f32 %v1514, 1e-30
        %v1643 = vmax.f32 %v1515, 1e-30
        %v1644 = vmax.f32 %v1516, 1e-30
        %v1645 = vmax.f32 %v1517, 1e-30
        %v1646 = vmax.f32 %v1518, 1e-30
        %v1647 = vmax.f32 %v1519, 1e-30
        %v1648 = vmax.f32 %v1520, 1e-30
        %v1649 = vmax.f32 %v1521, 1e-30
        %v1650 = vmax.f32 %v1522, 1e-30
        %v1651 = vmax.f32 %v1523, 1e-30
        %v1652 = vmax.f32 %v1524, 1e-30
        %v1653 = vmax.f32 %v1525, 1e-30
        %v1654 = vmax.f32 %v1526, 1e-30
        %v1655 = vmax.f32 %v1527, 1e-30
        %v1656 = vmax.f32 %v1528, 1e-30
        %v1657 = vmax.f32 %v1529, 1e-30
        %v1658 = vmax.f32 %v1530, 1e-30
        %v1659 = vmax.f32 %v1531, 1e-30
        %v1660 = vmax.f32 %v1532, 1e-30
        %v1661 = vmax.f32 %v1533, 1e-30
        %v1662 = vmax.f32 %v1534, 1e-30
        %v1663 = vmax.f32 %v1535, 1e-30
        %v1664 = vmax.f32 %v1536, 1e-30
        %v1665 = vmax.f32 %v1537, 1e-30
        %v1666 = vmax.f32 %v1538, 1e-30
        %v1667 = vmax.f32 %v1539, 1e-30
        %v1668 = vmax.f32 %v1540, 1e-30
        %v1669 = vmax.f32 %v1541, 1e-30
        %v1670 = vmax.f32 %v1542, 1e-30
        %v1671 = vmax.f32 %v1543, 1e-30
        %v1672 = vmax.f32 %v1544, 1e-30
        %v1673 = vmax.f32 %v1545, 1e-30
        %v1674 = vmax.f32 %v1546, 1e-30
        %v1675 = vmax.f32 %v1547, 1e-30
        %v1676 = vmax.f32 %v1548, 1e-30
        %v1677 = vmax.f32 %v1549, 1e-30
        %v1678 = vmax.f32 %v1550, 1e-30
        %v1679 = vmax.f32 %v1551, 1e-30
        %v1680 = vmax.f32 %v1552, 1e-30
        %v1681 = vmax.f32 %v1553, 1e-30
        %v1682 = vmax.f32 %v1554, 1e-30
        %v1683 = vmax.f32 %v1555, 1e-30
        %v1684 = vmax.f32 %v1556, 1e-30
        %v1685 = vmax.f32 %v1557, 1e-30
        %v1686 = vmax.f32 %v1558, 1e-30
        %v1687 = vmax.f32 %v1559, 1e-30
        %v1688 = vmax.f32 %v1560, 1e-30
        %v1689 = vmax.f32 %v1561, 1e-30
        %v1690 = vmax.f32 %v1562, 1e-30
        %v1691 = vmax.f32 %v1563, 1e-30
        %v1692 = vmax.f32 %v1564, 1e-30
        %v1693 = vmax.f32 %v1565, 1e-30
        %v1694 = vmax.f32 %v1566, 1e-30
        %v1695 = vmax.f32 %v1567, 1e-30
        %v1696 = vmax.f32 %v1568, 1e-30
        %v1697 = vmax.f32 %v1569, 1e-30
        %v1698 = vmax.f32 %v1570, 1e-30
        %v1699 = vmax.f32 %v1571, 1e-30
        %v1700 = vmax.f32 %v1572, 1e-30
        %v1701 = vmax.f32 %v1573, 1e-30
        %v1702 = vmax.f32 %v1574, 1e-30
        %v1703 = vmax.f32 %v1575, 1e-30
        %v1704 = vmax.f32 %v1576, 1e-30
        %v1705 = vmax.f32 %v1577, 1e-30
        %v1706 = vmax.f32 %v1578, 1e-30
        %v1707 = vmax.f32 %v1579, 1e-30
        %v1708 = vmax.f32 %v1580, 1e-30
        %v1709 = vmax.f32 %v1581, 1e-30
        %v1710 = vmax.f32 %v1582, 1e-30
        %v1711 = vmax.f32 %v1583, 1e-30
        %v1712 = vmax.f32 %v1584, 1e-30
        %v1713 = vmax.f32 %v1585, 1e-30
        %v1714 = vmax.f32 %v1586, 1e-30
        %v1715 = vmax.f32 %v1587, 1e-30
        %v1716 = vmax.f32 %v1588, 1e-30
        %v1717 = vmax.f32 %v1589, 1e-30
        %v1718 = vmax.f32 %v1590, 1e-30
        %v1719 = vmax.f32 %v1591, 1e-30
        %v1720 = vmax.f32 %v1592, 1e-30
        %v1721 = vmax.f32 %v1593, 1e-30
        %v1722 = vmax.f32 %v1594, 1e-30
        %v1723 = vmax.f32 %v1595, 1e-30
        %v1724 = vmax.f32 %v1596, 1e-30
        %v1725 = vmax.f32 %v1597, 1e-30
        %v1726 = vmax.f32 %v1598, 1e-30
        %v1727 = vmax.f32 %v1599, 1e-30
        %v1728 = vmax.f32 %v1600, 1e-30
        %v1729 = vmax.f32 %v1601, 1e-30
        %v1730 = vmax.f32 %v1602, 1e-30
        %v1731 = vmax.f32 %v1603, 1e-30
        %v1732 = vmax.f32 %v1604, 1e-30
        %v1733 = vmax.f32 %v1605, 1e-30
        %v1734 = vmax.f32 %v1606, 1e-30
        %v1735 = vmax.f32 %v1607, 1e-30
        %v1736 = vmax.f32 %v1608, 1e-30
        %s1737 = sld [smem:[#allocation3]]
        %v1738 = vstv %s1737
        %v1739 = vmul.f32 %v1609, %v1738
        %v1740 = vmul.f32 %v1610, %v1738
        %v1741 = vmul.f32 %v1611, %v1738
        %v1742 = vmul.f32 %v1612, %v1738
        %v1743 = vmul.f32 %v1613, %v1738
        %v1744 = vmul.f32 %v1614, %v1738
        %v1745 = vmul.f32 %v1615, %v1738
        %v1746 = vmul.f32 %v1616, %v1738
        %v1747 = vmul.f32 %v1617, %v1738
        %v1748 = vmul.f32 %v1618, %v1738
        %v1749 = vmul.f32 %v1619, %v1738
        %v1750 = vmul.f32 %v1620, %v1738
        %v1751 = vmul.f32 %v1621, %v1738
        %v1752 = vmul.f32 %v1622, %v1738
        %v1753 = vmul.f32 %v1623, %v1738
        %v1754 = vmul.f32 %v1624, %v1738
        %v1755 = vmul.f32 %v1625, %v1738
        %v1756 = vmul.f32 %v1626, %v1738
        %v1757 = vmul.f32 %v1627, %v1738
        %v1758 = vmul.f32 %v1628, %v1738
        %v1759 = vmul.f32 %v1629, %v1738
        %v1760 = vmul.f32 %v1630, %v1738
        %v1761 = vmul.f32 %v1631, %v1738
        %v1762 = vmul.f32 %v1632, %v1738
        %v1763 = vmul.f32 %v1633, %v1738
        %v1764 = vmul.f32 %v1634, %v1738
        %v1765 = vmul.f32 %v1635, %v1738
        %v1766 = vmul.f32 %v1636, %v1738
        %v1767 = vmul.f32 %v1637, %v1738
        %v1768 = vmul.f32 %v1638, %v1738
        %v1769 = vmul.f32 %v1639, %v1738
        %v1770 = vmul.f32 %v1640, %v1738
        %v1771 = vmul.f32 %v1641, %v1738
        %v1772 = vmul.f32 %v1642, %v1738
        %v1773 = vmul.f32 %v1643, %v1738
        %v1774 = vmul.f32 %v1644, %v1738
        %v1775 = vmul.f32 %v1645, %v1738
        %v1776 = vmul.f32 %v1646, %v1738
        %v1777 = vmul.f32 %v1647, %v1738
        %v1778 = vmul.f32 %v1648, %v1738
        %v1779 = vmul.f32 %v1649, %v1738
        %v1780 = vmul.f32 %v1650, %v1738
        %v1781 = vmul.f32 %v1651, %v1738
        %v1782 = vmul.f32 %v1652, %v1738
        %v1783 = vmul.f32 %v1653, %v1738
        %v1784 = vmul.f32 %v1654, %v1738
        %v1785 = vmul.f32 %v1655, %v1738
        %v1786 = vmul.f32 %v1656, %v1738
        %v1787 = vmul.f32 %v1657, %v1738
        %v1788 = vmul.f32 %v1658, %v1738
        %v1789 = vmul.f32 %v1659, %v1738
        %v1790 = vmul.f32 %v1660, %v1738
        %v1791 = vmul.f32 %v1661, %v1738
        %v1792 = vmul.f32 %v1662, %v1738
        %v1793 = vmul.f32 %v1663, %v1738
        %v1794 = vmul.f32 %v1664, %v1738
        %v1795 = vmul.f32 %v1665, %v1738
        %v1796 = vmul.f32 %v1666, %v1738
        %v1797 = vmul.f32 %v1667, %v1738
        %v1798 = vmul.f32 %v1668, %v1738
        %v1799 = vmul.f32 %v1669, %v1738
        %v1800 = vmul.f32 %v1670, %v1738
        %v1801 = vmul.f32 %v1671, %v1738
        %v1802 = vmul.f32 %v1672, %v1738
        %v1803 = vmul.f32 %v1673, %v1738
        %v1804 = vmul.f32 %v1674, %v1738
        %v1805 = vmul.f32 %v1675, %v1738
        %v1806 = vmul.f32 %v1676, %v1738
        %v1807 = vmul.f32 %v1677, %v1738
        %v1808 = vmul.f32 %v1678, %v1738
        %v1809 = vmul.f32 %v1679, %v1738
        %v1810 = vmul.f32 %v1680, %v1738
        %v1811 = vmul.f32 %v1681, %v1738
        %v1812 = vmul.f32 %v1682, %v1738
        %v1813 = vmul.f32 %v1683, %v1738
        %v1814 = vmul.f32 %v1684, %v1738
        %v1815 = vmul.f32 %v1685, %v1738
        %v1816 = vmul.f32 %v1686, %v1738
        %v1817 = vmul.f32 %v1687, %v1738
        %v1818 = vmul.f32 %v1688, %v1738
        %v1819 = vmul.f32 %v1689, %v1738
        %v1820 = vmul.f32 %v1690, %v1738
        %v1821 = vmul.f32 %v1691, %v1738
        %v1822 = vmul.f32 %v1692, %v1738
        %v1823 = vmul.f32 %v1693, %v1738
        %v1824 = vmul.f32 %v1694, %v1738
        %v1825 = vmul.f32 %v1695, %v1738
        %v1826 = vmul.f32 %v1696, %v1738
        %v1827 = vmul.f32 %v1697, %v1738
        %v1828 = vmul.f32 %v1698, %v1738
        %v1829 = vmul.f32 %v1699, %v1738
        %v1830 = vmul.f32 %v1700, %v1738
        %v1831 = vmul.f32 %v1701, %v1738
        %v1832 = vmul.f32 %v1702, %v1738
        %v1833 = vmul.f32 %v1703, %v1738
        %v1834 = vmul.f32 %v1704, %v1738
        %v1835 = vmul.f32 %v1705, %v1738
        %v1836 = vmul.f32 %v1706, %v1738
        %v1837 = vmul.f32 %v1707, %v1738
        %v1838 = vmul.f32 %v1708, %v1738
        %v1839 = vmul.f32 %v1709, %v1738
        %v1840 = vmul.f32 %v1710, %v1738
        %v1841 = vmul.f32 %v1711, %v1738
        %v1842 = vmul.f32 %v1712, %v1738
        %v1843 = vmul.f32 %v1713, %v1738
        %v1844 = vmul.f32 %v1714, %v1738
        %v1845 = vmul.f32 %v1715, %v1738
        %v1846 = vmul.f32 %v1716, %v1738
        %v1847 = vmul.f32 %v1717, %v1738
        %v1848 = vmul.f32 %v1718, %v1738
        %v1849 = vmul.f32 %v1719, %v1738
        %v1850 = vmul.f32 %v1720, %v1738
        %v1851 = vmul.f32 %v1721, %v1738
        %v1852 = vmul.f32 %v1722, %v1738
        %v1853 = vmul.f32 %v1723, %v1738
        %v1854 = vmul.f32 %v1724, %v1738
        %v1855 = vmul.f32 %v1725, %v1738
        %v1856 = vmul.f32 %v1726, %v1738
        %v1857 = vmul.f32 %v1727, %v1738
        %v1858 = vmul.f32 %v1728, %v1738
        %v1859 = vmul.f32 %v1729, %v1738
        %v1860 = vmul.f32 %v1730, %v1738
        %v1861 = vmul.f32 %v1731, %v1738
        %v1862 = vmul.f32 %v1732, %v1738
        %v1863 = vmul.f32 %v1733, %v1738
        %v1864 = vmul.f32 %v1734, %v1738
        %v1865 = vmul.f32 %v1735, %v1738
        %v1866 = vmul.f32 %v1736, %v1738
        %v1867 = vmul.f32 %v1739, 1.442695
        %v1868 = vpow.pop %v1867
        %v1869 = vmul.f32 %v1740, 1.442695
        %v1870 = vpow.pop %v1869
        %v1871 = vmul.f32 %v1741, 1.442695
        %v1872 = vpow.pop %v1871
        %v1873 = vmul.f32 %v1742, 1.442695
        %v1874 = vpow.pop %v1873
        %v1875 = vmul.f32 %v1743, 1.442695
        %v1876 = vpow.pop %v1875
        %v1877 = vmul.f32 %v1744, 1.442695
        %v1878 = vpow.pop %v1877
        %v1879 = vmul.f32 %v1745, 1.442695
        %v1880 = vpow.pop %v1879
        %v1881 = vmul.f32 %v1746, 1.442695
        %v1882 = vpow.pop %v1881
        %v1883 = vmul.f32 %v1747, 1.442695
        %v1884 = vpow.pop %v1883
        %v1885 = vmul.f32 %v1748, 1.442695
        %v1886 = vpow.pop %v1885
        %v1887 = vmul.f32 %v1749, 1.442695
        %v1888 = vpow.pop %v1887
        %v1889 = vmul.f32 %v1750, 1.442695
        %v1890 = vpow.pop %v1889
        %v1891 = vmul.f32 %v1751, 1.442695
        %v1892 = vpow.pop %v1891
        %v1893 = vmul.f32 %v1752, 1.442695
        %v1894 = vpow.pop %v1893
        %v1895 = vmul.f32 %v1753, 1.442695
        %v1896 = vpow.pop %v1895
        %v1897 = vmul.f32 %v1754, 1.442695
        %v1898 = vpow.pop %v1897
        %v1899 = vmul.f32 %v1755, 1.442695
        %v1900 = vpow.pop %v1899
        %v1901 = vmul.f32 %v1756, 1.442695
        %v1902 = vpow.pop %v1901
        %v1903 = vmul.f32 %v1757, 1.442695
        %v1904 = vpow.pop %v1903
        %v1905 = vmul.f32 %v1758, 1.442695
        %v1906 = vpow.pop %v1905
        %v1907 = vmul.f32 %v1759, 1.442695
        %v1908 = vpow.pop %v1907
        %v1909 = vmul.f32 %v1760, 1.442695
        %v1910 = vpow.pop %v1909
        %v1911 = vmul.f32 %v1761, 1.442695
        %v1912 = vpow.pop %v1911
        %v1913 = vmul.f32 %v1762, 1.442695
        %v1914 = vpow.pop %v1913
        %v1915 = vmul.f32 %v1763, 1.442695
        %v1916 = vpow.pop %v1915
        %v1917 = vmul.f32 %v1764, 1.442695
        %v1918 = vpow.pop %v1917
        %v1919 = vmul.f32 %v1765, 1.442695
        %v1920 = vpow.pop %v1919
        %v1921 = vmul.f32 %v1766, 1.442695
        %v1922 = vpow.pop %v1921
        %v1923 = vmul.f32 %v1767, 1.442695
        %v1924 = vpow.pop %v1923
        %v1925 = vmul.f32 %v1768, 1.442695
        %v1926 = vpow.pop %v1925
        %v1927 = vmul.f32 %v1769, 1.442695
        %v1928 = vpow.pop %v1927
        %v1929 = vmul.f32 %v1770, 1.442695
        %v1930 = vpow.pop %v1929
        %v1931 = vmul.f32 %v1771, 1.442695
        %v1932 = vpow.pop %v1931
        %v1933 = vmul.f32 %v1772, 1.442695
        %v1934 = vpow.pop %v1933
        %v1935 = vmul.f32 %v1773, 1.442695
        %v1936 = vpow.pop %v1935
        %v1937 = vmul.f32 %v1774, 1.442695
        %v1938 = vpow.pop %v1937
        %v1939 = vmul.f32 %v1775, 1.442695
        %v1940 = vpow.pop %v1939
        %v1941 = vmul.f32 %v1776, 1.442695
        %v1942 = vpow.pop %v1941
        %v1943 = vmul.f32 %v1777, 1.442695
        %v1944 = vpow.pop %v1943
        %v1945 = vmul.f32 %v1778, 1.442695
        %v1946 = vpow.pop %v1945
        %v1947 = vmul.f32 %v1779, 1.442695
        %v1948 = vpow.pop %v1947
        %v1949 = vmul.f32 %v1780, 1.442695
        %v1950 = vpow.pop %v1949
        %v1951 = vmul.f32 %v1781, 1.442695
        %v1952 = vpow.pop %v1951
        %v1953 = vmul.f32 %v1782, 1.442695
        %v1954 = vpow.pop %v1953
        %v1955 = vmul.f32 %v1783, 1.442695
        %v1956 = vpow.pop %v1955
        %v1957 = vmul.f32 %v1784, 1.442695
        %v1958 = vpow.pop %v1957
        %v1959 = vmul.f32 %v1785, 1.442695
        %v1960 = vpow.pop %v1959
        %v1961 = vmul.f32 %v1786, 1.442695
        %v1962 = vpow.pop %v1961
        %v1963 = vmul.f32 %v1787, 1.442695
        %v1964 = vpow.pop %v1963
        %v1965 = vmul.f32 %v1788, 1.442695
        %v1966 = vpow.pop %v1965
        %v1967 = vmul.f32 %v1789, 1.442695
        %v1968 = vpow.pop %v1967
        %v1969 = vmul.f32 %v1790, 1.442695
        %v1970 = vpow.pop %v1969
        %v1971 = vmul.f32 %v1791, 1.442695
        %v1972 = vpow.pop %v1971
        %v1973 = vmul.f32 %v1792, 1.442695
        %v1974 = vpow.pop %v1973
        %v1975 = vmul.f32 %v1793, 1.442695
        %v1976 = vpow.pop %v1975
        %v1977 = vmul.f32 %v1794, 1.442695
        %v1978 = vpow.pop %v1977
        %v1979 = vmul.f32 %v1795, 1.442695
        %v1980 = vpow.pop %v1979
        %v1981 = vmul.f32 %v1796, 1.442695
        %v1982 = vpow.pop %v1981
        %v1983 = vmul.f32 %v1797, 1.442695
        %v1984 = vpow.pop %v1983
        %v1985 = vmul.f32 %v1798, 1.442695
        %v1986 = vpow.pop %v1985
        %v1987 = vmul.f32 %v1799, 1.442695
        %v1988 = vpow.pop %v1987
        %v1989 = vmul.f32 %v1800, 1.442695
        %v1990 = vpow.pop %v1989
        %v1991 = vmul.f32 %v1801, 1.442695
        %v1992 = vpow.pop %v1991
        %v1993 = vmul.f32 %v1802, 1.442695
        %v1994 = vpow.pop %v1993
        %v1995 = vmul.f32 %v1803, 1.442695
        %v1996 = vpow.pop %v1995
        %v1997 = vmul.f32 %v1804, 1.442695
        %v1998 = vpow.pop %v1997
        %v1999 = vmul.f32 %v1805, 1.442695
        %v2000 = vpow.pop %v1999
        %v2001 = vmul.f32 %v1806, 1.442695
        %v2002 = vpow.pop %v2001
        %v2003 = vmul.f32 %v1807, 1.442695
        %v2004 = vpow.pop %v2003
        %v2005 = vmul.f32 %v1808, 1.442695
        %v2006 = vpow.pop %v2005
        %v2007 = vmul.f32 %v1809, 1.442695
        %v2008 = vpow.pop %v2007
        %v2009 = vmul.f32 %v1810, 1.442695
        %v2010 = vpow.pop %v2009
        %v2011 = vmul.f32 %v1811, 1.442695
        %v2012 = vpow.pop %v2011
        %v2013 = vmul.f32 %v1812, 1.442695
        %v2014 = vpow.pop %v2013
        %v2015 = vmul.f32 %v1813, 1.442695
        %v2016 = vpow.pop %v2015
        %v2017 = vmul.f32 %v1814, 1.442695
        %v2018 = vpow.pop %v2017
        %v2019 = vmul.f32 %v1815, 1.442695
        %v2020 = vpow.pop %v2019
        %v2021 = vmul.f32 %v1816, 1.442695
        %v2022 = vpow.pop %v2021
        %v2023 = vmul.f32 %v1817, 1.442695
        %v2024 = vpow.pop %v2023
        %v2025 = vmul.f32 %v1818, 1.442695
        %v2026 = vpow.pop %v2025
        %v2027 = vmul.f32 %v1819, 1.442695
        %v2028 = vpow.pop %v2027
        %v2029 = vmul.f32 %v1820, 1.442695
        %v2030 = vpow.pop %v2029
        %v2031 = vmul.f32 %v1821, 1.442695
        %v2032 = vpow.pop %v2031
        %v2033 = vmul.f32 %v1822, 1.442695
        %v2034 = vpow.pop %v2033
        %v2035 = vmul.f32 %v1823, 1.442695
        %v2036 = vpow.pop %v2035
        %v2037 = vmul.f32 %v1824, 1.442695
        %v2038 = vpow.pop %v2037
        %v2039 = vmul.f32 %v1825, 1.442695
        %v2040 = vpow.pop %v2039
        %v2041 = vmul.f32 %v1826, 1.442695
        %v2042 = vpow.pop %v2041
        %v2043 = vmul.f32 %v1827, 1.442695
        %v2044 = vpow.pop %v2043
        %v2045 = vmul.f32 %v1828, 1.442695
        %v2046 = vpow.pop %v2045
        %v2047 = vmul.f32 %v1829, 1.442695
        %v2048 = vpow.pop %v2047
        %v2049 = vmul.f32 %v1830, 1.442695
        %v2050 = vpow.pop %v2049
        %v2051 = vmul.f32 %v1831, 1.442695
        %v2052 = vpow.pop %v2051
        %v2053 = vmul.f32 %v1832, 1.442695
        %v2054 = vpow.pop %v2053
        %v2055 = vmul.f32 %v1833, 1.442695
        %v2056 = vpow.pop %v2055
        %v2057 = vmul.f32 %v1834, 1.442695
        %v2058 = vpow.pop %v2057
        %v2059 = vmul.f32 %v1835, 1.442695
        %v2060 = vpow.pop %v2059
        %v2061 = vmul.f32 %v1836, 1.442695
        %v2062 = vpow.pop %v2061
        %v2063 = vmul.f32 %v1837, 1.442695
        %v2064 = vpow.pop %v2063
        %v2065 = vmul.f32 %v1838, 1.442695
        %v2066 = vpow.pop %v2065
        %v2067 = vmul.f32 %v1839, 1.442695
        %v2068 = vpow.pop %v2067
        %v2069 = vmul.f32 %v1840, 1.442695
        %v2070 = vpow.pop %v2069
        %v2071 = vmul.f32 %v1841, 1.442695
        %v2072 = vpow.pop %v2071
        %v2073 = vmul.f32 %v1842, 1.442695
        %v2074 = vpow.pop %v2073
        %v2075 = vmul.f32 %v1843, 1.442695
        %v2076 = vpow.pop %v2075
        %v2077 = vmul.f32 %v1844, 1.442695
        %v2078 = vpow.pop %v2077
        %v2079 = vmul.f32 %v1845, 1.442695
        %v2080 = vpow.pop %v2079
        %v2081 = vmul.f32 %v1846, 1.442695
        %v2082 = vpow.pop %v2081
        %v2083 = vmul.f32 %v1847, 1.442695
        %v2084 = vpow.pop %v2083
        %v2085 = vmul.f32 %v1848, 1.442695
        %v2086 = vpow.pop %v2085
        %v2087 = vmul.f32 %v1849, 1.442695
        %v2088 = vpow.pop %v2087
        %v2089 = vmul.f32 %v1850, 1.442695
        %v2090 = vpow.pop %v2089
        %v2091 = vmul.f32 %v1851, 1.442695
        %v2092 = vpow.pop %v2091
        %v2093 = vmul.f32 %v1852, 1.442695
        %v2094 = vpow.pop %v2093
        %v2095 = vmul.f32 %v1853, 1.442695
        %v2096 = vpow.pop %v2095
        %v2097 = vmul.f32 %v1854, 1.442695
        %v2098 = vpow.pop %v2097
        %v2099 = vmul.f32 %v1855, 1.442695
        %v2100 = vpow.pop %v2099
        %v2101 = vmul.f32 %v1856, 1.442695
        %v2102 = vpow.pop %v2101
        %v2103 = vmul.f32 %v1857, 1.442695
        %v2104 = vpow.pop %v2103
        %v2105 = vmul.f32 %v1858, 1.442695
        %v2106 = vpow.pop %v2105
        %v2107 = vmul.f32 %v1859, 1.442695
        %v2108 = vpow.pop %v2107
        %v2109 = vmul.f32 %v1860, 1.442695
        %v2110 = vpow.pop %v2109
        %v2111 = vmul.f32 %v1861, 1.442695
        %v2112 = vpow.pop %v2111
        %v2113 = vmul.f32 %v1862, 1.442695
        %v2114 = vpow.pop %v2113
        %v2115 = vmul.f32 %v1863, 1.442695
        %v2116 = vpow.pop %v2115
        %v2117 = vmul.f32 %v1864, 1.442695
        %v2118 = vpow.pop %v2117
        %v2119 = vmul.f32 %v1865, 1.442695
        %v2120 = vpow.pop %v2119
        %v2121 = vmul.f32 %v1866, 1.442695
        %v2122 = vpow.pop %v2121
        %2123 = vst [vmem:[%s291] sm:$0xff] %v1868
        %2124 = vst [vmem:[%s291 + $0x8] sm:$0xff] %v1870
        %2125 = vst [vmem:[%s291 + $0x10] sm:$0xff] %v1872
        %2126 = vst [vmem:[%s291 + $0x18] sm:$0xff] %v1874
        %2127 = vst [vmem:[%s291 + $0x20] sm:$0xff] %v1876
        %2128 = vst [vmem:[%s291 + $0x28] sm:$0xff] %v1878
        %2129 = vst [vmem:[%s291 + $0x30] sm:$0xff] %v1880
        %2130 = vst [vmem:[%s291 + $0x38] sm:$0xff] %v1882
        %2131 = vst [vmem:[%s291 + $0x40] sm:$0xff] %v1884
        %2132 = vst [vmem:[%s291 + $0x48] sm:$0xff] %v1886
        %2133 = vst [vmem:[%s291 + $0x50] sm:$0xff] %v1888
        %2134 = vst [vmem:[%s291 + $0x58] sm:$0xff] %v1890
        %2135 = vst [vmem:[%s291 + $0x60] sm:$0xff] %v1892
        %2136 = vst [vmem:[%s291 + $0x68] sm:$0xff] %v1894
        %2137 = vst [vmem:[%s291 + $0x70] sm:$0xff] %v1896
        %2138 = vst [vmem:[%s291 + $0x78] sm:$0xff] %v1898
        %2139 = vst [vmem:[%s291 + $0x80] sm:$0xff] %v1900
        %2140 = vst [vmem:[%s291 + $0x88] sm:$0xff] %v1902
        %2141 = vst [vmem:[%s291 + $0x90] sm:$0xff] %v1904
        %2142 = vst [vmem:[%s291 + $0x98] sm:$0xff] %v1906
        %2143 = vst [vmem:[%s291 + $0xa0] sm:$0xff] %v1908
        %2144 = vst [vmem:[%s291 + $0xa8] sm:$0xff] %v1910
        %2145 = vst [vmem:[%s291 + $0xb0] sm:$0xff] %v1912
        %2146 = vst [vmem:[%s291 + $0xb8] sm:$0xff] %v1914
        %2147 = vst [vmem:[%s291 + $0xc0] sm:$0xff] %v1916
        %2148 = vst [vmem:[%s291 + $0xc8] sm:$0xff] %v1918
        %2149 = vst [vmem:[%s291 + $0xd0] sm:$0xff] %v1920
        %2150 = vst [vmem:[%s291 + $0xd8] sm:$0xff] %v1922
        %2151 = vst [vmem:[%s291 + $0xe0] sm:$0xff] %v1924
        %2152 = vst [vmem:[%s291 + $0xe8] sm:$0xff] %v1926
        %2153 = vst [vmem:[%s291 + $0xf0] sm:$0xff] %v1928
        %2154 = vst [vmem:[%s291 + $0xf8] sm:$0xff] %v1930
        %2155 = vst [vmem:[%s291 + $0x100] sm:$0xff] %v1932
        %2156 = vst [vmem:[%s291 + $0x108] sm:$0xff] %v1934
        %2157 = vst [vmem:[%s291 + $0x110] sm:$0xff] %v1936
        %2158 = vst [vmem:[%s291 + $0x118] sm:$0xff] %v1938
        %2159 = vst [vmem:[%s291 + $0x120] sm:$0xff] %v1940
        %2160 = vst [vmem:[%s291 + $0x128] sm:$0xff] %v1942
        %2161 = vst [vmem:[%s291 + $0x130] sm:$0xff] %v1944
        %2162 = vst [vmem:[%s291 + $0x138] sm:$0xff] %v1946
        %2163 = vst [vmem:[%s291 + $0x140] sm:$0xff] %v1948
        %2164 = vst [vmem:[%s291 + $0x148] sm:$0xff] %v1950
        %2165 = vst [vmem:[%s291 + $0x150] sm:$0xff] %v1952
        %2166 = vst [vmem:[%s291 + $0x158] sm:$0xff] %v1954
        %2167 = vst [vmem:[%s291 + $0x160] sm:$0xff] %v1956
        %2168 = vst [vmem:[%s291 + $0x168] sm:$0xff] %v1958
        %2169 = vst [vmem:[%s291 + $0x170] sm:$0xff] %v1960
        %2170 = vst [vmem:[%s291 + $0x178] sm:$0xff] %v1962
        %2171 = vst [vmem:[%s291 + $0x180] sm:$0xff] %v1964
        %2172 = vst [vmem:[%s291 + $0x188] sm:$0xff] %v1966
        %2173 = vst [vmem:[%s291 + $0x190] sm:$0xff] %v1968
        %2174 = vst [vmem:[%s291 + $0x198] sm:$0xff] %v1970
        %2175 = vst [vmem:[%s291 + $0x1a0] sm:$0xff] %v1972
        %2176 = vst [vmem:[%s291 + $0x1a8] sm:$0xff] %v1974
        %2177 = vst [vmem:[%s291 + $0x1b0] sm:$0xff] %v1976
        %2178 = vst [vmem:[%s291 + $0x1b8] sm:$0xff] %v1978
        %2179 = vst [vmem:[%s291 + $0x1c0] sm:$0xff] %v1980
        %2180 = vst [vmem:[%s291 + $0x1c8] sm:$0xff] %v1982
        %2181 = vst [vmem:[%s291 + $0x1d0] sm:$0xff] %v1984
        %2182 = vst [vmem:[%s291 + $0x1d8] sm:$0xff] %v1986
        %2183 = vst [vmem:[%s291 + $0x1e0] sm:$0xff] %v1988
        %2184 = vst [vmem:[%s291 + $0x1e8] sm:$0xff] %v1990
        %2185 = vst [vmem:[%s291 + $0x1f0] sm:$0xff] %v1992
        %2186 = vst [vmem:[%s291 + $0x1f8] sm:$0xff] %v1994
        %2187 = vst [vmem:[%s291 + $0x200] sm:$0xff] %v1996
        %2188 = vst [vmem:[%s291 + $0x208] sm:$0xff] %v1998
        %2189 = vst [vmem:[%s291 + $0x210] sm:$0xff] %v2000
        %2190 = vst [vmem:[%s291 + $0x218] sm:$0xff] %v2002
        %2191 = vst [vmem:[%s291 + $0x220] sm:$0xff] %v2004
        %2192 = vst [vmem:[%s291 + $0x228] sm:$0xff] %v2006
        %2193 = vst [vmem:[%s291 + $0x230] sm:$0xff] %v2008
        %2194 = vst [vmem:[%s291 + $0x238] sm:$0xff] %v2010
        %2195 = vst [vmem:[%s291 + $0x240] sm:$0xff] %v2012
        %2196 = vst [vmem:[%s291 + $0x248] sm:$0xff] %v2014
        %2197 = vst [vmem:[%s291 + $0x250] sm:$0xff] %v2016
        %2198 = vst [vmem:[%s291 + $0x258] sm:$0xff] %v2018
        %2199 = vst [vmem:[%s291 + $0x260] sm:$0xff] %v2020
        %2200 = vst [vmem:[%s291 + $0x268] sm:$0xff] %v2022
        %2201 = vst [vmem:[%s291 + $0x270] sm:$0xff] %v2024
        %2202 = vst [vmem:[%s291 + $0x278] sm:$0xff] %v2026
        %2203 = vst [vmem:[%s291 + $0x280] sm:$0xff] %v2028
        %2204 = vst [vmem:[%s291 + $0x288] sm:$0xff] %v2030
        %2205 = vst [vmem:[%s291 + $0x290] sm:$0xff] %v2032
        %2206 = vst [vmem:[%s291 + $0x298] sm:$0xff] %v2034
        %2207 = vst [vmem:[%s291 + $0x2a0] sm:$0xff] %v2036
        %2208 = vst [vmem:[%s291 + $0x2a8] sm:$0xff] %v2038
        %2209 = vst [vmem:[%s291 + $0x2b0] sm:$0xff] %v2040
        %2210 = vst [vmem:[%s291 + $0x2b8] sm:$0xff] %v2042
        %2211 = vst [vmem:[%s291 + $0x2c0] sm:$0xff] %v2044
        %2212 = vst [vmem:[%s291 + $0x2c8] sm:$0xff] %v2046
        %2213 = vst [vmem:[%s291 + $0x2d0] sm:$0xff] %v2048
        %2214 = vst [vmem:[%s291 + $0x2d8] sm:$0xff] %v2050
        %2215 = vst [vmem:[%s291 + $0x2e0] sm:$0xff] %v2052
        %2216 = vst [vmem:[%s291 + $0x2e8] sm:$0xff] %v2054
        %2217 = vst [vmem:[%s291 + $0x2f0] sm:$0xff] %v2056
        %2218 = vst [vmem:[%s291 + $0x2f8] sm:$0xff] %v2058
        %2219 = vst [vmem:[%s291 + $0x300] sm:$0xff] %v2060
        %2220 = vst [vmem:[%s291 + $0x308] sm:$0xff] %v2062
        %2221 = vst [vmem:[%s291 + $0x310] sm:$0xff] %v2064
        %2222 = vst [vmem:[%s291 + $0x318] sm:$0xff] %v2066
        %2223 = vst [vmem:[%s291 + $0x320] sm:$0xff] %v2068
        %2224 = vst [vmem:[%s291 + $0x328] sm:$0xff] %v2070
        %2225 = vst [vmem:[%s291 + $0x330] sm:$0xff] %v2072
        %2226 = vst [vmem:[%s291 + $0x338] sm:$0xff] %v2074
        %2227 = vst [vmem:[%s291 + $0x340] sm:$0xff] %v2076
        %2228 = vst [vmem:[%s291 + $0x348] sm:$0xff] %v2078
        %2229 = vst [vmem:[%s291 + $0x350] sm:$0xff] %v2080
        %2230 = vst [vmem:[%s291 + $0x358] sm:$0xff] %v2082
        %2231 = vst [vmem:[%s291 + $0x360] sm:$0xff] %v2084
        %2232 = vst [vmem:[%s291 + $0x368] sm:$0xff] %v2086
        %2233 = vst [vmem:[%s291 + $0x370] sm:$0xff] %v2088
        %2234 = vst [vmem:[%s291 + $0x378] sm:$0xff] %v2090
        %2235 = vst [vmem:[%s291 + $0x380] sm:$0xff] %v2092
        %2236 = vst [vmem:[%s291 + $0x388] sm:$0xff] %v2094
        %2237 = vst [vmem:[%s291 + $0x390] sm:$0xff] %v2096
        %2238 = vst [vmem:[%s291 + $0x398] sm:$0xff] %v2098
        %2239 = vst [vmem:[%s291 + $0x3a0] sm:$0xff] %v2100
        %2240 = vst [vmem:[%s291 + $0x3a8] sm:$0xff] %v2102
        %2241 = vst [vmem:[%s291 + $0x3b0] sm:$0xff] %v2104
        %2242 = vst [vmem:[%s291 + $0x3b8] sm:$0xff] %v2106
        %2243 = vst [vmem:[%s291 + $0x3c0] sm:$0xff] %v2108
        %2244 = vst [vmem:[%s291 + $0x3c8] sm:$0xff] %v2110
        %2245 = vst [vmem:[%s291 + $0x3d0] sm:$0xff] %v2112
        %2246 = vst [vmem:[%s291 + $0x3d8] sm:$0xff] %v2114
        %2247 = vst [vmem:[%s291 + $0x3e0] sm:$0xff] %v2116
        %2248 = vst [vmem:[%s291 + $0x3e8] sm:$0xff] %v2118
        %2249 = vst [vmem:[%s291 + $0x3f0] sm:$0xff] %v2120
        %2250 = vst [vmem:[%s291 + $0x3f8] sm:$0xff] %v2122
        %s2251 = sand.u32 %s146, 1
        %s2252 = scalar_lea.sflag [#allocation6], %s2251
        %s2253 = sand.u32 %s146, 1
        %s2254 = smul.addr %s2253, 1024
        %s2255 = scalar_lea.vmem [#allocation5], %s2254
        // Predicated region
        $region60: #{_gaussian_kernel_call.1} parent=54 // pred_check
          %p2256 = pneg %p156
        $region61: #{_gaussian_kernel_call.1} parent=54 // pred_check_branch
          %2258 = sbr.rel (%p2256) target = $region63
        $region62: #{_gaussian_kernel_call.1} parent=54 // pred_region
          %s2259 = smul.u32 32, %s24
          %s2260 = smul.u32 4, %s25
          %s2262 = ssub.s32 16384, 16384
          %2263 = vsyncadd %s2252, %s2262
          %s2264 = smul.addr %s2259, 4
          %s2265 = sadd.s32 %s2260, %s2264
          %s2266 = smul.addr %s2265, 128
          %s2267 = scalar_lea.hbm %s5, %s2266
          %s2268 = sshll.u32 %s2255, 4
          %s2269 = int_to_ptr.vmem [resolvable:$true] %s2268
          %2274 = dma.vmem_to_hbm [thread:$0]  %s2269, 16384, %s2267, %s2252, 512, 512, 32
        $region63: #{_gaussian_kernel_call.1} parent=54 // pred_fallthru
          _
      $region55: #{_gaussian_kernel_call.1} parent=5 // pred_fallthru
        _
      %p2275 = scmp.le.s32.totalorder 2, %s15
      // Predicated region
      $region64: #{_gaussian_kernel_call.1} parent=5 // pred_check
        %p2276 = pneg %p2275
      $region65: #{_gaussian_kernel_call.1} parent=5 // pred_check_branch
        %2278 = sbr.rel (%p2276) target = $region67
      $region66: #{_gaussian_kernel_call.1} parent=5 // pred_region
        %s2279 = ssub.s32 %s15, 2
        // Predicated region
        $region68: #{_gaussian_kernel_call.1} parent=66 // pred_check
          %p2280 = pneg %p162
        $region69: #{_gaussian_kernel_call.1} parent=66 // pred_check_branch
          %2282 = sbr.rel (%p2280) target = $region71
        $region70: #{_gaussian_kernel_call.1} parent=66 // pred_region
          %s2283 = sand.u32 %s147, 1
          %s2284 = scalar_lea.sflag [#allocation6], %s2283
          %s2285 = sand.u32 %s147, 1
          %s2286 = smul.addr %s2285, 1024
          %s2287 = scalar_lea.vmem [#allocation5], %s2286
          %2288 = dma.done %s2284, 16384
        $region71: #{_gaussian_kernel_call.1} parent=66 // pred_fallthru
          _
      $region67: #{_gaussian_kernel_call.1} parent=5 // pred_fallthru
        _
    $region6: #{_gaussian_kernel_call.1} parent=1 // loop_footer
      %s19 = sadd.s32 1, %s15
    $region7: #{_gaussian_kernel_call.1} parent=1 // loop_footer_branch
      %14 = sbr.rel target = $region3
    $region8: #{_gaussian_kernel_call.1} parent=1 // loop_exit
      _
    %2289 = vsyncpa [#allocation6], 1
    %s2290 = scalar_lea.sflag [#allocation6], 1
    %2291 = vsyncpa %s2290, 1

</llo_original>
